<compile_context>
chip_gen: v5e
topology: v5e:2x2
jax: 0.10.0
libtpu: 0.0.40
codegen_flags: <defaults>
</compile_context>

<pallas_src>
import jax
import jax.numpy as jnp
from jax.experimental import pallas as pl
from jax.experimental.pallas import tpu as pltpu

LN_EPS = 1e-5


def _layernorm(h, gamma, beta):
    # Two independent row reductions (E[x] and E[x^2]) instead of the
    # dependent (h - mu)**2 second pass; var = E[x^2] - mu^2 (clamped at 0).
    n = h.shape[-1]
    inv_n = 1.0 / float(n)   # true feature count (no padded lanes here)
    mu = jnp.sum(h, axis=-1, keepdims=True) * inv_n
    mean_sq = jnp.sum(h * h, axis=-1, keepdims=True) * inv_n
    var = jnp.maximum(mean_sq - mu * mu, 0.0)
    return (h - mu) * jax.lax.rsqrt(var + LN_EPS) * gamma + beta


def surrogate_kernel(x_ref,
                     g1_ref, be1_ref, w1_ref, b1_ref,
                     g2_ref, be2_ref, w2_ref, b2_ref,
                     g3_ref, be3_ref, w3_ref, b3_ref,
                     w4_ref, b4_ref,
                     out_ref):
    x = x_ref[...]

    # block 1: norm1 -> fc1 -> tanh   (dot inputs cast to the weight dtype,
    # f32 accumulation; elementwise work stays f32 for v5e's f32-only VPU/EUP)
    h = _layernorm(x, g1_ref[...], be1_ref[...])
    h = jnp.tanh(jnp.dot(h.astype(w1_ref.dtype), w1_ref[...],
                         preferred_element_type=jnp.float32) + b1_ref[...])

    # block 2: norm2 -> fc2 -> tanh
    h = _layernorm(h, g2_ref[...], be2_ref[...])
    h = jnp.tanh(jnp.dot(h.astype(w2_ref.dtype), w2_ref[...],
                         preferred_element_type=jnp.float32) + b2_ref[...])

    # block 3: norm3 -> fc3 -> tanh
    h = _layernorm(h, g3_ref[...], be3_ref[...])
    h = jnp.tanh(jnp.dot(h.astype(w3_ref.dtype), w3_ref[...],
                         preferred_element_type=jnp.float32) + b3_ref[...])

    # head: fc_eval into a lane-dense (tile_b, 128) block (padded cols are 0)
    out_ref[...] = (jnp.dot(h.astype(w4_ref.dtype), w4_ref[...],
                            preferred_element_type=jnp.float32) + b4_ref[...])


def _round_up(x, m):
    return ((x + m - 1) // m) * m


def _pick_tile_b(b_pad):
    # b_pad is a multiple of 8. Largest tile in [8, 1024] that divides b_pad
    # while leaving >= 2 grid steps (pipelining + v7x dual-TC sharding).
    # Falls back to the whole padded batch (grid=(1,)).
    for t in (1024, 512, 256, 128, 64, 32, 16, 8):
        if b_pad % t == 0 and b_pad // t >= 2:
            return t
    return b_pad


def surrogate_forward(x, params, *, tile_b=None, dot_dtype=jnp.float32):
    B, input_dim = x.shape
    n_rewards = params["w4"].shape[1]
    mlp_dim = params["w1"].shape[1]
    half_dim = params["w3"].shape[1]

    # Robustness: pad the batch up to a sublane multiple (and to a multiple of
    # the chosen tile). Padded rows are zeros; LayerNorm on an all-zero row is
    # finite (var clamped at 0, rsqrt(eps)) so no NaNs leak; rows are sliced
    # off at the end.
    b_pad = _round_up(B, 8)
    if tile_b is None:
        tile_b = _pick_tile_b(b_pad)
    b_pad = _round_up(b_pad, tile_b)
    if b_pad != B:
        x = jnp.pad(x, ((0, b_pad - B), (0, 0)))

    # Lane-dense output: pad final weight/bias columns up to a multiple of 128
    # so the output store is a full unmasked vreg-wide block. (For tiny
    # n_rewards this trades some extra HBM writeback for unmasked vst + an
    # aligned, contiguous output DMA.)
    out_pad = max(128, _round_up(n_rewards, 128))

    w1 = params["w1"].astype(dot_dtype)
    w2 = params["w2"].astype(dot_dtype)
    w3 = params["w3"].astype(dot_dtype)
    w4 = jnp.pad(params["w4"], ((0, 0), (0, out_pad - n_rewards))).astype(dot_dtype)
    b4 = jnp.pad(params["b4"], ((0, 0), (0, out_pad - n_rewards)))

    # TODO(synk): hidden feature dims (32/16) stay un-padded; padding them to
    # 128 lanes would need masked LayerNorm statistics to keep semantics.
    ordered = [params["g1"], params["be1"], w1, params["b1"],
               params["g2"], params["be2"], w2, params["b2"],
               params["g3"], params["be3"], w3, params["b3"],
               w4, b4]

    def full2d(arr):
        # whole (small) parameter array; same block every grid step, so the
        # pipeline fetches it once and keeps it resident in VMEM.
        return pl.BlockSpec(arr.shape, lambda i: (0, 0))

    in_specs = [pl.BlockSpec((tile_b, input_dim), lambda i: (i, 0))]
    in_specs += [full2d(a) for a in ordered]

    weight_bytes = sum(int(a.size) * a.dtype.itemsize for a in ordered)
    flops = 2 * b_pad * (input_dim * mlp_dim + mlp_dim * mlp_dim
                         + mlp_dim * half_dim + half_dim * out_pad)
    cost = pl.CostEstimate(
        flops=flops,
        transcendentals=b_pad * (2 * mlp_dim + half_dim),   # tanh activations
        bytes_accessed=b_pad * input_dim * 4 + b_pad * out_pad * 4 + weight_bytes,
    )

    out_padded = pl.pallas_call(
        surrogate_kernel,
        out_shape=jax.ShapeDtypeStruct((b_pad, out_pad), jnp.float32),
        grid_spec=pltpu.PrefetchScalarGridSpec(
            num_scalar_prefetch=0,
            grid=(b_pad // tile_b,),
            in_specs=in_specs,
            out_specs=pl.BlockSpec((tile_b, out_pad), lambda i: (i, 0)),
        ),
        compiler_params=pltpu.CompilerParams(
            dimension_semantics=("parallel",),
            vmem_limit_bytes=32 * 1024 * 1024,
        ),
        cost_estimate=cost,
    )(x, *ordered)

    return out_padded[:B, :n_rewards]


def init_params(key, input_dim, mlp_dim, n_rewards):
    """Deterministic init mimicking PyTorch defaults (Linear: U(-1/sqrt(fan_in), .);
    LayerNorm: gamma=1, beta=0). Weights stored transposed as [in, out]."""
    ks = jax.random.split(key, 8)

    def linear(kw, kb, fan_in, fan_out):
        bound = 1.0 / jnp.sqrt(jnp.float32(fan_in))
        w = jax.random.uniform(kw, (fan_in, fan_out), jnp.float32, -bound, bound)
        b = jax.random.uniform(kb, (1, fan_out), jnp.float32, -bound, bound)
        return w, b

    w1, b1 = linear(ks[0], ks[1], input_dim, mlp_dim)
    w2, b2 = linear(ks[2], ks[3], mlp_dim, mlp_dim)
    w3, b3 = linear(ks[4], ks[5], mlp_dim, mlp_dim // 2)
    w4, b4 = linear(ks[6], ks[7], mlp_dim // 2, n_rewards)

    return {
        "g1": jnp.ones((1, input_dim), jnp.float32),
        "be1": jnp.zeros((1, input_dim), jnp.float32),
        "w1": w1, "b1": b1,
        "g2": jnp.ones((1, mlp_dim), jnp.float32),
        "be2": jnp.zeros((1, mlp_dim), jnp.float32),
        "w2": w2, "b2": b2,
        "g3": jnp.ones((1, mlp_dim), jnp.float32),
        "be3": jnp.zeros((1, mlp_dim), jnp.float32),
        "w3": w3, "b3": b3,
        "w4": w4, "b4": b4,
    }


def reference_forward(x, p):
    """Pure-JAX reference replicating the PyTorch forward."""
    def ln(h, g, b):
        mu = jnp.mean(h, axis=-1, keepdims=True)
        var = jnp.mean((h - mu) ** 2, axis=-1, keepdims=True)
        return (h - mu) / jnp.sqrt(var + LN_EPS) * g + b

    h = jnp.tanh(ln(x, p["g1"], p["be1"]) @ p["w1"] + p["b1"])
    h = jnp.tanh(ln(h, p["g2"], p["be2"]) @ p["w2"] + p["b2"])
    h = jnp.tanh(ln(h, p["g3"], p["be3"]) @ p["w3"] + p["b3"])
    return h @ p["w4"] + p["b4"]


if __name__ == "__main__":
    input_dim, mlp_dim, n_rewards = 32, 32, 4
    batch = 256   # tile_b=128 -> grid=(2,): pipelined + shards across v7x TCs

    key = jax.random.PRNGKey(0)
    kx, kp = jax.random.split(key)
    x = jax.random.normal(kx, (batch, input_dim), jnp.float32)
    params = init_params(kp, input_dim, mlp_dim, n_rewards)

    ref = reference_forward(x, params)

    # f32 path: matches the reference closely.
    out = jax.block_until_ready(surrogate_forward(x, params))
    assert out.shape == (batch, n_rewards)
    assert jnp.allclose(out, ref, atol=1e-4, rtol=1e-4)

    # bf16-weight / bf16-dot path (halves weight DMA on v6e/v7x); LN, bias and
    # tanh stay f32, accumulation is f32 -> only a small quantization error.
    out_bf16 = jax.block_until_ready(
        surrogate_forward(x, params, dot_dtype=jnp.bfloat16))
    assert out_bf16.shape == (batch, n_rewards)
    assert jnp.allclose(out_bf16, ref, atol=1e-1, rtol=1e-1)

    # Ragged batch (exercises the batch-padding path; B=100 -> padded to 104).
    out_odd = jax.block_until_ready(surrogate_forward(x[:100], params))
    assert out_odd.shape == (100, n_rewards)
    assert jnp.allclose(out_odd, ref[:100], atol=1e-4, rtol=1e-4)

    print("KERNEL_OK")
</pallas_src>

<mosaic_0001>
module attributes {stable_mosaic.version = 11 : i64} {
  func.func @surrogate_kernel(%arg0: i32, %arg1: memref<128x32xf32, #tpu.memory_space<vmem>>, %arg2: memref<1x32xf32, #tpu.memory_space<vmem>>, %arg3: memref<1x32xf32, #tpu.memory_space<vmem>>, %arg4: memref<32x32xf32, #tpu.memory_space<vmem>>, %arg5: memref<1x32xf32, #tpu.memory_space<vmem>>, %arg6: memref<1x32xf32, #tpu.memory_space<vmem>>, %arg7: memref<1x32xf32, #tpu.memory_space<vmem>>, %arg8: memref<32x32xf32, #tpu.memory_space<vmem>>, %arg9: memref<1x32xf32, #tpu.memory_space<vmem>>, %arg10: memref<1x32xf32, #tpu.memory_space<vmem>>, %arg11: memref<1x32xf32, #tpu.memory_space<vmem>>, %arg12: memref<32x16xf32, #tpu.memory_space<vmem>>, %arg13: memref<1x16xf32, #tpu.memory_space<vmem>>, %arg14: memref<16x128xf32, #tpu.memory_space<vmem>>, %arg15: memref<1x128xf32, #tpu.memory_space<vmem>>, %arg16: memref<128x128xf32, #tpu.memory_space<vmem>>) attributes {dimension_semantics = [#tpu.dimension_semantics<parallel>], iteration_bounds = array<i64: 2>, scalar_prefetch = 0 : i64, scratch_operands = 0 : i64, tpu.core_type = #tpu.core_type<tc>, window_params = [{transform_indices = @transform_0, window_bounds = array<i64: 128, 32>}, {pipeline_mode = #tpu.pipeline_mode<synchronous>, transform_indices = @transform_1, window_bounds = array<i64: 1, 32>}, {pipeline_mode = #tpu.pipeline_mode<synchronous>, transform_indices = @transform_2, window_bounds = array<i64: 1, 32>}, {pipeline_mode = #tpu.pipeline_mode<synchronous>, transform_indices = @transform_3, window_bounds = array<i64: 32, 32>}, {pipeline_mode = #tpu.pipeline_mode<synchronous>, transform_indices = @transform_4, window_bounds = array<i64: 1, 32>}, {pipeline_mode = #tpu.pipeline_mode<synchronous>, transform_indices = @transform_5, window_bounds = array<i64: 1, 32>}, {pipeline_mode = #tpu.pipeline_mode<synchronous>, transform_indices = @transform_6, window_bounds = array<i64: 1, 32>}, {pipeline_mode = #tpu.pipeline_mode<synchronous>, transform_indices = @transform_7, window_bounds = array<i64: 32, 32>}, {pipeline_mode = #tpu.pipeline_mode<synchronous>, transform_indices = @transform_8, window_bounds = array<i64: 1, 32>}, {pipeline_mode = #tpu.pipeline_mode<synchronous>, transform_indices = @transform_9, window_bounds = array<i64: 1, 32>}, {pipeline_mode = #tpu.pipeline_mode<synchronous>, transform_indices = @transform_10, window_bounds = array<i64: 1, 32>}, {pipeline_mode = #tpu.pipeline_mode<synchronous>, transform_indices = @transform_11, window_bounds = array<i64: 32, 16>}, {pipeline_mode = #tpu.pipeline_mode<synchronous>, transform_indices = @transform_12, window_bounds = array<i64: 1, 16>}, {pipeline_mode = #tpu.pipeline_mode<synchronous>, transform_indices = @transform_13, window_bounds = array<i64: 16, 128>}, {pipeline_mode = #tpu.pipeline_mode<synchronous>, transform_indices = @transform_14, window_bounds = array<i64: 1, 128>}, {transform_indices = @transform_15, window_bounds = array<i64: 128, 128>}]} {
    %c0 = arith.constant 0 : index
    %c0_0 = arith.constant 0 : index
    %0 = vector.load %arg1[%c0, %c0_0] : memref<128x32xf32, #tpu.memory_space<vmem>>, vector<128x32xf32>
    %c0_1 = arith.constant 0 : index
    %c0_2 = arith.constant 0 : index
    %1 = vector.load %arg2[%c0_1, %c0_2] : memref<1x32xf32, #tpu.memory_space<vmem>>, vector<1x32xf32>
    %c0_3 = arith.constant 0 : index
    %c0_4 = arith.constant 0 : index
    %2 = vector.load %arg3[%c0_3, %c0_4] : memref<1x32xf32, #tpu.memory_space<vmem>>, vector<1x32xf32>
    %cst = arith.constant dense<0.000000e+00> : vector<128xf32>
    %3 = vector.multi_reduction <add>, %0, %cst [1] : vector<128x32xf32> to vector<128xf32>
    %4 = vector.shape_cast %3 : vector<128xf32> to vector<128x1xf32>
    %cst_5 = arith.constant 3.125000e-02 : f32
    %5 = vector.broadcast %cst_5 : f32 to vector<128x1xf32>
    %6 = arith.mulf %4, %5 : vector<128x1xf32>
    %7 = arith.mulf %0, %0 : vector<128x32xf32>
    %cst_6 = arith.constant dense<0.000000e+00> : vector<128xf32>
    %8 = vector.multi_reduction <add>, %7, %cst_6 [1] : vector<128x32xf32> to vector<128xf32>
    %9 = vector.shape_cast %8 : vector<128xf32> to vector<128x1xf32>
    %cst_7 = arith.constant 3.125000e-02 : f32
    %10 = vector.broadcast %cst_7 : f32 to vector<128x1xf32>
    %11 = arith.mulf %9, %10 : vector<128x1xf32>
    %12 = arith.mulf %6, %6 : vector<128x1xf32>
    %13 = arith.subf %11, %12 : vector<128x1xf32>
    %cst_8 = arith.constant 0.000000e+00 : f32
    %14 = vector.broadcast %cst_8 : f32 to vector<128x1xf32>
    %15 = arith.maximumf %13, %14 : vector<128x1xf32>
    %16 = vector.broadcast %6 : vector<128x1xf32> to vector<128x32xf32>
    %17 = arith.subf %0, %16 : vector<128x32xf32>
    %cst_9 = arith.constant 9.99999974E-6 : f32
    %18 = vector.broadcast %cst_9 : f32 to vector<128x1xf32>
    %19 = arith.addf %15, %18 : vector<128x1xf32>
    %20 = math.rsqrt %19 : vector<128x1xf32>
    %21 = vector.broadcast %20 : vector<128x1xf32> to vector<128x32xf32>
    %22 = arith.mulf %17, %21 : vector<128x32xf32>
    %23 = vector.broadcast %1 : vector<1x32xf32> to vector<128x32xf32>
    %24 = arith.mulf %22, %23 : vector<128x32xf32>
    %25 = vector.broadcast %2 : vector<1x32xf32> to vector<128x32xf32>
    %26 = arith.addf %24, %25 : vector<128x32xf32>
    %c0_10 = arith.constant 0 : index
    %c0_11 = arith.constant 0 : index
    %27 = vector.load %arg4[%c0_10, %c0_11] : memref<32x32xf32, #tpu.memory_space<vmem>>, vector<32x32xf32>
    %cst_12 = arith.constant dense<0.000000e+00> : vector<128x32xf32>
    %28 = tpu.matmul %26, %27, %cst_12 {dimension_numbers = #tpu.dot_dimension_numbers<[1], [0], [0], [1], [0, 0, 1, 1], [], []>} : vector<128x32xf32>, vector<32x32xf32>, vector<128x32xf32> -> vector<128x32xf32>
    %c0_13 = arith.constant 0 : index
    %c0_14 = arith.constant 0 : index
    %29 = vector.load %arg5[%c0_13, %c0_14] : memref<1x32xf32, #tpu.memory_space<vmem>>, vector<1x32xf32>
    %30 = vector.broadcast %29 : vector<1x32xf32> to vector<128x32xf32>
    %31 = arith.addf %28, %30 : vector<128x32xf32>
    %32 = math.tanh %31 : vector<128x32xf32>
    %c0_15 = arith.constant 0 : index
    %c0_16 = arith.constant 0 : index
    %33 = vector.load %arg6[%c0_15, %c0_16] : memref<1x32xf32, #tpu.memory_space<vmem>>, vector<1x32xf32>
    %c0_17 = arith.constant 0 : index
    %c0_18 = arith.constant 0 : index
    %34 = vector.load %arg7[%c0_17, %c0_18] : memref<1x32xf32, #tpu.memory_space<vmem>>, vector<1x32xf32>
    %cst_19 = arith.constant dense<0.000000e+00> : vector<128xf32>
    %35 = vector.multi_reduction <add>, %32, %cst_19 [1] : vector<128x32xf32> to vector<128xf32>
    %36 = vector.shape_cast %35 : vector<128xf32> to vector<128x1xf32>
    %cst_20 = arith.constant 3.125000e-02 : f32
    %37 = vector.broadcast %cst_20 : f32 to vector<128x1xf32>
    %38 = arith.mulf %36, %37 : vector<128x1xf32>
    %39 = arith.mulf %32, %32 : vector<128x32xf32>
    %cst_21 = arith.constant dense<0.000000e+00> : vector<128xf32>
    %40 = vector.multi_reduction <add>, %39, %cst_21 [1] : vector<128x32xf32> to vector<128xf32>
    %41 = vector.shape_cast %40 : vector<128xf32> to vector<128x1xf32>
    %cst_22 = arith.constant 3.125000e-02 : f32
    %42 = vector.broadcast %cst_22 : f32 to vector<128x1xf32>
    %43 = arith.mulf %41, %42 : vector<128x1xf32>
    %44 = arith.mulf %38, %38 : vector<128x1xf32>
    %45 = arith.subf %43, %44 : vector<128x1xf32>
    %cst_23 = arith.constant 0.000000e+00 : f32
    %46 = vector.broadcast %cst_23 : f32 to vector<128x1xf32>
    %47 = arith.maximumf %45, %46 : vector<128x1xf32>
    %48 = vector.broadcast %38 : vector<128x1xf32> to vector<128x32xf32>
    %49 = arith.subf %32, %48 : vector<128x32xf32>
    %cst_24 = arith.constant 9.99999974E-6 : f32
    %50 = vector.broadcast %cst_24 : f32 to vector<128x1xf32>
    %51 = arith.addf %47, %50 : vector<128x1xf32>
    %52 = math.rsqrt %51 : vector<128x1xf32>
    %53 = vector.broadcast %52 : vector<128x1xf32> to vector<128x32xf32>
    %54 = arith.mulf %49, %53 : vector<128x32xf32>
    %55 = vector.broadcast %33 : vector<1x32xf32> to vector<128x32xf32>
    %56 = arith.mulf %54, %55 : vector<128x32xf32>
    %57 = vector.broadcast %34 : vector<1x32xf32> to vector<128x32xf32>
    %58 = arith.addf %56, %57 : vector<128x32xf32>
    %c0_25 = arith.constant 0 : index
    %c0_26 = arith.constant 0 : index
    %59 = vector.load %arg8[%c0_25, %c0_26] : memref<32x32xf32, #tpu.memory_space<vmem>>, vector<32x32xf32>
    %cst_27 = arith.constant dense<0.000000e+00> : vector<128x32xf32>
    %60 = tpu.matmul %58, %59, %cst_27 {dimension_numbers = #tpu.dot_dimension_numbers<[1], [0], [0], [1], [0, 0, 1, 1], [], []>} : vector<128x32xf32>, vector<32x32xf32>, vector<128x32xf32> -> vector<128x32xf32>
    %c0_28 = arith.constant 0 : index
    %c0_29 = arith.constant 0 : index
    %61 = vector.load %arg9[%c0_28, %c0_29] : memref<1x32xf32, #tpu.memory_space<vmem>>, vector<1x32xf32>
    %62 = vector.broadcast %61 : vector<1x32xf32> to vector<128x32xf32>
    %63 = arith.addf %60, %62 : vector<128x32xf32>
    %64 = math.tanh %63 : vector<128x32xf32>
    %c0_30 = arith.constant 0 : index
    %c0_31 = arith.constant 0 : index
    %65 = vector.load %arg10[%c0_30, %c0_31] : memref<1x32xf32, #tpu.memory_space<vmem>>, vector<1x32xf32>
    %c0_32 = arith.constant 0 : index
    %c0_33 = arith.constant 0 : index
    %66 = vector.load %arg11[%c0_32, %c0_33] : memref<1x32xf32, #tpu.memory_space<vmem>>, vector<1x32xf32>
    %cst_34 = arith.constant dense<0.000000e+00> : vector<128xf32>
    %67 = vector.multi_reduction <add>, %64, %cst_34 [1] : vector<128x32xf32> to vector<128xf32>
    %68 = vector.shape_cast %67 : vector<128xf32> to vector<128x1xf32>
    %cst_35 = arith.constant 3.125000e-02 : f32
    %69 = vector.broadcast %cst_35 : f32 to vector<128x1xf32>
    %70 = arith.mulf %68, %69 : vector<128x1xf32>
    %71 = arith.mulf %64, %64 : vector<128x32xf32>
    %cst_36 = arith.constant dense<0.000000e+00> : vector<128xf32>
    %72 = vector.multi_reduction <add>, %71, %cst_36 [1] : vector<128x32xf32> to vector<128xf32>
    %73 = vector.shape_cast %72 : vector<128xf32> to vector<128x1xf32>
    %cst_37 = arith.constant 3.125000e-02 : f32
    %74 = vector.broadcast %cst_37 : f32 to vector<128x1xf32>
    %75 = arith.mulf %73, %74 : vector<128x1xf32>
    %76 = arith.mulf %70, %70 : vector<128x1xf32>
    %77 = arith.subf %75, %76 : vector<128x1xf32>
    %cst_38 = arith.constant 0.000000e+00 : f32
    %78 = vector.broadcast %cst_38 : f32 to vector<128x1xf32>
    %79 = arith.maximumf %77, %78 : vector<128x1xf32>
    %80 = vector.broadcast %70 : vector<128x1xf32> to vector<128x32xf32>
    %81 = arith.subf %64, %80 : vector<128x32xf32>
    %cst_39 = arith.constant 9.99999974E-6 : f32
    %82 = vector.broadcast %cst_39 : f32 to vector<128x1xf32>
    %83 = arith.addf %79, %82 : vector<128x1xf32>
    %84 = math.rsqrt %83 : vector<128x1xf32>
    %85 = vector.broadcast %84 : vector<128x1xf32> to vector<128x32xf32>
    %86 = arith.mulf %81, %85 : vector<128x32xf32>
    %87 = vector.broadcast %65 : vector<1x32xf32> to vector<128x32xf32>
    %88 = arith.mulf %86, %87 : vector<128x32xf32>
    %89 = vector.broadcast %66 : vector<1x32xf32> to vector<128x32xf32>
    %90 = arith.addf %88, %89 : vector<128x32xf32>
    %c0_40 = arith.constant 0 : index
    %c0_41 = arith.constant 0 : index
    %91 = vector.load %arg12[%c0_40, %c0_41] : memref<32x16xf32, #tpu.memory_space<vmem>>, vector<32x16xf32>
    %cst_42 = arith.constant dense<0.000000e+00> : vector<128x16xf32>
    %92 = tpu.matmul %90, %91, %cst_42 {dimension_numbers = #tpu.dot_dimension_numbers<[1], [0], [0], [1], [0, 0, 1, 1], [], []>} : vector<128x32xf32>, vector<32x16xf32>, vector<128x16xf32> -> vector<128x16xf32>
    %c0_43 = arith.constant 0 : index
    %c0_44 = arith.constant 0 : index
    %93 = vector.load %arg13[%c0_43, %c0_44] : memref<1x16xf32, #tpu.memory_space<vmem>>, vector<1x16xf32>
    %94 = vector.broadcast %93 : vector<1x16xf32> to vector<128x16xf32>
    %95 = arith.addf %92, %94 : vector<128x16xf32>
    %96 = math.tanh %95 : vector<128x16xf32>
    %c0_45 = arith.constant 0 : index
    %c0_46 = arith.constant 0 : index
    %97 = vector.load %arg14[%c0_45, %c0_46] : memref<16x128xf32, #tpu.memory_space<vmem>>, vector<16x128xf32>
    %cst_47 = arith.constant dense<0.000000e+00> : vector<128x128xf32>
    %98 = tpu.matmul %96, %97, %cst_47 {dimension_numbers = #tpu.dot_dimension_numbers<[1], [0], [0], [1], [0, 0, 1, 1], [], []>} : vector<128x16xf32>, vector<16x128xf32>, vector<128x128xf32> -> vector<128x128xf32>
    %c0_48 = arith.constant 0 : index
    %c0_49 = arith.constant 0 : index
    %99 = vector.load %arg15[%c0_48, %c0_49] : memref<1x128xf32, #tpu.memory_space<vmem>>, vector<1x128xf32>
    %100 = vector.broadcast %99 : vector<1x128xf32> to vector<128x128xf32>
    %101 = arith.addf %98, %100 : vector<128x128xf32>
    %c0_50 = arith.constant 0 : index
    %c0_51 = arith.constant 0 : index
    %102 = vector.load %arg16[%c0_50, %c0_51] : memref<128x128xf32, #tpu.memory_space<vmem>>, vector<128x128xf32>
    tpu.vector_store %arg16[%c0_50, %c0_51], %101 {strides = array<i32>} : memref<128x128xf32, #tpu.memory_space<vmem>>, vector<128x128xf32>,
    return
  }
  func.func @transform_0(%arg0: i32) -> (i32, i32) {
    %c0_i32 = arith.constant 0 : i32
    %c0_i32_0 = arith.constant 0 : i32
    return %arg0, %c0_i32 : i32, i32
  }
  func.func @transform_1(%arg0: i32) -> (i32, i32) {
    %c0_i32 = arith.constant 0 : i32
    %c0_i32_0 = arith.constant 0 : i32
    %c0_i32_1 = arith.constant 0 : i32
    return %c0_i32, %c0_i32_0 : i32, i32
  }
  func.func @transform_2(%arg0: i32) -> (i32, i32) {
    %c0_i32 = arith.constant 0 : i32
    %c0_i32_0 = arith.constant 0 : i32
    %c0_i32_1 = arith.constant 0 : i32
    return %c0_i32, %c0_i32_0 : i32, i32
  }
  func.func @transform_3(%arg0: i32) -> (i32, i32) {
    %c0_i32 = arith.constant 0 : i32
    %c0_i32_0 = arith.constant 0 : i32
    %c0_i32_1 = arith.constant 0 : i32
    return %c0_i32, %c0_i32_0 : i32, i32
  }
  func.func @transform_4(%arg0: i32) -> (i32, i32) {
    %c0_i32 = arith.constant 0 : i32
    %c0_i32_0 = arith.constant 0 : i32
    %c0_i32_1 = arith.constant 0 : i32
    return %c0_i32, %c0_i32_0 : i32, i32
  }
  func.func @transform_5(%arg0: i32) -> (i32, i32) {
    %c0_i32 = arith.constant 0 : i32
    %c0_i32_0 = arith.constant 0 : i32
    %c0_i32_1 = arith.constant 0 : i32
    return %c0_i32, %c0_i32_0 : i32, i32
  }
  func.func @transform_6(%arg0: i32) -> (i32, i32) {
    %c0_i32 = arith.constant 0 : i32
    %c0_i32_0 = arith.constant 0 : i32
    %c0_i32_1 = arith.constant 0 : i32
    return %c0_i32, %c0_i32_0 : i32, i32
  }
  func.func @transform_7(%arg0: i32) -> (i32, i32) {
    %c0_i32 = arith.constant 0 : i32
    %c0_i32_0 = arith.constant 0 : i32
    %c0_i32_1 = arith.constant 0 : i32
    return %c0_i32, %c0_i32_0 : i32, i32
  }
  func.func @transform_8(%arg0: i32) -> (i32, i32) {
    %c0_i32 = arith.constant 0 : i32
    %c0_i32_0 = arith.constant 0 : i32
    %c0_i32_1 = arith.constant 0 : i32
    return %c0_i32, %c0_i32_0 : i32, i32
  }
  func.func @transform_9(%arg0: i32) -> (i32, i32) {
    %c0_i32 = arith.constant 0 : i32
    %c0_i32_0 = arith.constant 0 : i32
    %c0_i32_1 = arith.constant 0 : i32
    return %c0_i32, %c0_i32_0 : i32, i32
  }
  func.func @transform_10(%arg0: i32) -> (i32, i32) {
    %c0_i32 = arith.constant 0 : i32
    %c0_i32_0 = arith.constant 0 : i32
    %c0_i32_1 = arith.constant 0 : i32
    return %c0_i32, %c0_i32_0 : i32, i32
  }
  func.func @transform_11(%arg0: i32) -> (i32, i32) {
    %c0_i32 = arith.constant 0 : i32
    %c0_i32_0 = arith.constant 0 : i32
    %c0_i32_1 = arith.constant 0 : i32
    return %c0_i32, %c0_i32_0 : i32, i32
  }
  func.func @transform_12(%arg0: i32) -> (i32, i32) {
    %c0_i32 = arith.constant 0 : i32
    %c0_i32_0 = arith.constant 0 : i32
    %c0_i32_1 = arith.constant 0 : i32
    return %c0_i32, %c0_i32_0 : i32, i32
  }
  func.func @transform_13(%arg0: i32) -> (i32, i32) {
    %c0_i32 = arith.constant 0 : i32
    %c0_i32_0 = arith.constant 0 : i32
    %c0_i32_1 = arith.constant 0 : i32
    return %c0_i32, %c0_i32_0 : i32, i32
  }
  func.func @transform_14(%arg0: i32) -> (i32, i32) {
    %c0_i32 = arith.constant 0 : i32
    %c0_i32_0 = arith.constant 0 : i32
    %c0_i32_1 = arith.constant 0 : i32
    return %c0_i32, %c0_i32_0 : i32, i32
  }
  func.func @transform_15(%arg0: i32) -> (i32, i32) {
    %c0_i32 = arith.constant 0 : i32
    %c0_i32_0 = arith.constant 0 : i32
    return %arg0, %c0_i32 : i32, i32
  }
}

</mosaic_0001>

<llo_original>
// kernel: tpu_custom_call.1
$region0: #{tpu_custom_call.1}
  #allocation0 [shape = 'u32[]', space=smem, size = 0x4, offset = 0x4, fixed_abs, tag = 'smem constant byte address 0x4 - core index']
  #allocation1 [shape = 'u32[72,128]{1,0:T(1,128)}', space=vmem, size = 0x9000, scoped, tag = 'internal scratch']
  %s0 = inlined_call_operand.vmem [shape: f32[256,32], index: 0, kind: input, shape index: {}]
  %s1 = inlined_call_operand.vmem [shape: f32[1,32], index: 1, kind: input, shape index: {}]
  %s2 = inlined_call_operand.vmem [shape: f32[1,32], index: 2, kind: input, shape index: {}]
  %s3 = inlined_call_operand.vmem [shape: f32[32,32], index: 3, kind: input, shape index: {}]
  %s4 = inlined_call_operand.vmem [shape: f32[1,32], index: 4, kind: input, shape index: {}]
  %s5 = inlined_call_operand.vmem [shape: f32[1,32], index: 5, kind: input, shape index: {}]
  %s6 = inlined_call_operand.vmem [shape: f32[1,32], index: 6, kind: input, shape index: {}]
  %s7 = inlined_call_operand.vmem [shape: f32[32,32], index: 7, kind: input, shape index: {}]
  %s8 = inlined_call_operand.vmem [shape: f32[1,32], index: 8, kind: input, shape index: {}]
  %s9 = inlined_call_operand.vmem [shape: f32[1,32], index: 9, kind: input, shape index: {}]
  %s10 = inlined_call_operand.vmem [shape: f32[1,32], index: 10, kind: input, shape index: {}]
  %s11 = inlined_call_operand.vmem [shape: f32[32,16], index: 11, kind: input, shape index: {}]
  %s12 = inlined_call_operand.vmem [shape: f32[1,16], index: 12, kind: input, shape index: {}]
  %s13 = inlined_call_operand.vmem [shape: f32[16,128], index: 13, kind: input, shape index: {}]
  %s14 = inlined_call_operand.vmem [shape: f32[1,128], index: 14, kind: input, shape index: {}]
  %s15 = inlined_call_operand.hbm [shape: f32[256,128], index: 15, kind: output, shape index: {}]
  %s16 = sld [smem:[#allocation0]]
  $region93: #{tpu_custom_call.1} parent=0
    _
  %s18 = ssub.s32 1, %s16
  %s19 = scalar_select 0, %s18, %s16
  $region1: #{tpu_custom_call.1} parent=0
    #allocation2 [shape = 'u8[131072]{0}', space=vmem, size = 0x20000, scoped, tag = 'output window, operand 0']
    #allocation3 [shape = 's32[2]{0}', space=sflag, size = 0x8, scoped, tag = 'scoped memory for tpu_custom_call.1']
    %20 = vsyncpa [#allocation3], 0
    %s21 = scalar_lea.sflag [#allocation3], 1
    %22 = vsyncpa %s21, 0
    loop: start=0, step=1, limit=4
    $region2: #{tpu_custom_call.1} parent=1 // loop_pre_header
      _
    $region3: #{tpu_custom_call.1} parent=1 // loop_header
      %s24 = sphi 0, %s28
      %p25 = scmp.ge.s32.totalorder %s24, 4
      %s34 = sphi 0, %s36
      %s37 = sphi 0, %s34
      %s38 = sphi 0, %s37
      %s54 = sphi 0, %s38
      %s58 = sphi 0, %s58
      %s60 = sphi 0, %s58
      %s61 = sphi 0, %s60
      %s75 = sphi 0, %s61
      %s79 = sphi 0, %s79
      %s81 = sphi 0, %s79
      %s82 = sphi 0, %s81
      %s96 = sphi 0, %s82
      %s100 = sphi 0, %s100
      %s102 = sphi 0, %s100
      %s103 = sphi 0, %s102
      %s117 = sphi 0, %s103
      %s121 = sphi 0, %s121
      %s123 = sphi 0, %s121
      %s124 = sphi 0, %s123
      %s138 = sphi 0, %s124
      %s142 = sphi 0, %s142
      %s144 = sphi 0, %s142
      %s145 = sphi 0, %s144
      %s159 = sphi 0, %s145
      %s163 = sphi 0, %s163
      %s165 = sphi 0, %s163
      %s166 = sphi 0, %s165
      %s180 = sphi 0, %s166
      %s184 = sphi 0, %s184
      %s186 = sphi 0, %s184
      %s187 = sphi 0, %s186
      %s201 = sphi 0, %s187
      %s205 = sphi 0, %s205
      %s207 = sphi 0, %s205
      %s208 = sphi 0, %s207
      %s222 = sphi 0, %s208
      %s226 = sphi 0, %s226
      %s228 = sphi 0, %s226
      %s229 = sphi 0, %s228
      %s243 = sphi 0, %s229
      %s247 = sphi 0, %s247
      %s249 = sphi 0, %s247
      %s250 = sphi 0, %s249
      %s264 = sphi 0, %s250
      %s268 = sphi 0, %s268
      %s270 = sphi 0, %s268
      %s271 = sphi 0, %s270
      %s285 = sphi 0, %s271
      %s289 = sphi 0, %s289
      %s291 = sphi 0, %s289
      %s292 = sphi 0, %s291
      %s306 = sphi 0, %s292
      %s310 = sphi 0, %s310
      %s312 = sphi 0, %s310
      %s313 = sphi 0, %s312
      %s327 = sphi 0, %s313
      %s331 = sphi 0, %s331
      %s333 = sphi 0, %s331
      %s334 = sphi 0, %s333
      %s348 = sphi 0, %s334
      %s354 = sphi 0, %s356
      %s357 = sphi 0, %s354
      %s358 = sphi 0, %s357
      %s374 = sphi 0, %s358
    $region4: #{tpu_custom_call.1} parent=1 // loop_header_branch
      %27 = sbr.rel (%p25) target = $region8
    $region5: #{tpu_custom_call.1} parent=1 // loop_body
      %s29 = ssub.s32 %s24, 1
      %s30 = ssub.s32 %s24, 2
      %s31 = sadd.s32 %s24, 1
      %s32 = ssub.s32 %s24, %s31
      %p33 = scmp.eq.s32.totalorder %s32, 0
      %s35 = sadd.s32 %s34, 1
      %s36 = scalar_select %p33, %s34, %s35
      %p39 = pneg %p33
      %p40 = scmp.eq.s32.totalorder %s24, 1
      %p41 = por %p39, %p40
      %p42 = scmp.ne.s32.totalorder %s34, %s37
      %p43 = scmp.eq.s32.totalorder %s24, 0
      %p44 = por %p42, %p43
      %p45 = scmp.ne.s32.totalorder %s34, %s37
      %p46 = scmp.eq.s32.totalorder %s29, 1
      %p47 = por %p45, %p46
      %p48 = scmp.ne.s32.totalorder %s37, %s38
      %p49 = scmp.eq.s32.totalorder %s29, 0
      %p50 = por %p48, %p49
      %p51 = scmp.ne.s32.totalorder %s37, %s38
      %p52 = scmp.eq.s32.totalorder %s30, 1
      %p53 = por %p51, %p52
      %p55 = scmp.ne.s32.totalorder %s38, %s54
      %p56 = scmp.eq.s32.totalorder %s30, 0
      %p57 = por %p55, %p56
      %s59 = sadd.s32 %s58, 1
      %p62 = scmp.eq.s32.totalorder %s24, 1
      %p63 = scmp.ne.s32.totalorder %s58, %s60
      %p64 = scmp.eq.s32.totalorder %s24, 0
      %p65 = por %p63, %p64
      %p66 = scmp.ne.s32.totalorder %s58, %s60
      %p67 = scmp.eq.s32.totalorder %s29, 1
      %p68 = por %p66, %p67
      %p69 = scmp.ne.s32.totalorder %s60, %s61
      %p70 = scmp.eq.s32.totalorder %s29, 0
      %p71 = por %p69, %p70
      %p72 = scmp.ne.s32.totalorder %s60, %s61
      %p73 = scmp.eq.s32.totalorder %s30, 1
      %p74 = por %p72, %p73
      %p76 = scmp.ne.s32.totalorder %s61, %s75
      %p77 = scmp.eq.s32.totalorder %s30, 0
      %p78 = por %p76, %p77
      %s80 = sadd.s32 %s79, 1
      %p83 = scmp.eq.s32.totalorder %s24, 1
      %p84 = scmp.ne.s32.totalorder %s79, %s81
      %p85 = scmp.eq.s32.totalorder %s24, 0
      %p86 = por %p84, %p85
      %p87 = scmp.ne.s32.totalorder %s79, %s81
      %p88 = scmp.eq.s32.totalorder %s29, 1
      %p89 = por %p87, %p88
      %p90 = scmp.ne.s32.totalorder %s81, %s82
      %p91 = scmp.eq.s32.totalorder %s29, 0
      %p92 = por %p90, %p91
      %p93 = scmp.ne.s32.totalorder %s81, %s82
      %p94 = scmp.eq.s32.totalorder %s30, 1
      %p95 = por %p93, %p94
      %p97 = scmp.ne.s32.totalorder %s82, %s96
      %p98 = scmp.eq.s32.totalorder %s30, 0
      %p99 = por %p97, %p98
      %s101 = sadd.s32 %s100, 1
      %p104 = scmp.eq.s32.totalorder %s24, 1
      %p105 = scmp.ne.s32.totalorder %s100, %s102
      %p106 = scmp.eq.s32.totalorder %s24, 0
      %p107 = por %p105, %p106
      %p108 = scmp.ne.s32.totalorder %s100, %s102
      %p109 = scmp.eq.s32.totalorder %s29, 1
      %p110 = por %p108, %p109
      %p111 = scmp.ne.s32.totalorder %s102, %s103
      %p112 = scmp.eq.s32.totalorder %s29, 0
      %p113 = por %p111, %p112
      %p114 = scmp.ne.s32.totalorder %s102, %s103
      %p115 = scmp.eq.s32.totalorder %s30, 1
      %p116 = por %p114, %p115
      %p118 = scmp.ne.s32.totalorder %s103, %s117
      %p119 = scmp.eq.s32.totalorder %s30, 0
      %p120 = por %p118, %p119
      %s122 = sadd.s32 %s121, 1
      %p125 = scmp.eq.s32.totalorder %s24, 1
      %p126 = scmp.ne.s32.totalorder %s121, %s123
      %p127 = scmp.eq.s32.totalorder %s24, 0
      %p128 = por %p126, %p127
      %p129 = scmp.ne.s32.totalorder %s121, %s123
      %p130 = scmp.eq.s32.totalorder %s29, 1
      %p131 = por %p129, %p130
      %p132 = scmp.ne.s32.totalorder %s123, %s124
      %p133 = scmp.eq.s32.totalorder %s29, 0
      %p134 = por %p132, %p133
      %p135 = scmp.ne.s32.totalorder %s123, %s124
      %p136 = scmp.eq.s32.totalorder %s30, 1
      %p137 = por %p135, %p136
      %p139 = scmp.ne.s32.totalorder %s124, %s138
      %p140 = scmp.eq.s32.totalorder %s30, 0
      %p141 = por %p139, %p140
      %s143 = sadd.s32 %s142, 1
      %p146 = scmp.eq.s32.totalorder %s24, 1
      %p147 = scmp.ne.s32.totalorder %s142, %s144
      %p148 = scmp.eq.s32.totalorder %s24, 0
      %p149 = por %p147, %p148
      %p150 = scmp.ne.s32.totalorder %s142, %s144
      %p151 = scmp.eq.s32.totalorder %s29, 1
      %p152 = por %p150, %p151
      %p153 = scmp.ne.s32.totalorder %s144, %s145
      %p154 = scmp.eq.s32.totalorder %s29, 0
      %p155 = por %p153, %p154
      %p156 = scmp.ne.s32.totalorder %s144, %s145
      %p157 = scmp.eq.s32.totalorder %s30, 1
      %p158 = por %p156, %p157
      %p160 = scmp.ne.s32.totalorder %s145, %s159
      %p161 = scmp.eq.s32.totalorder %s30, 0
      %p162 = por %p160, %p161
      %s164 = sadd.s32 %s163, 1
      %p167 = scmp.eq.s32.totalorder %s24, 1
      %p168 = scmp.ne.s32.totalorder %s163, %s165
      %p169 = scmp.eq.s32.totalorder %s24, 0
      %p170 = por %p168, %p169
      %p171 = scmp.ne.s32.totalorder %s163, %s165
      %p172 = scmp.eq.s32.totalorder %s29, 1
      %p173 = por %p171, %p172
      %p174 = scmp.ne.s32.totalorder %s165, %s166
      %p175 = scmp.eq.s32.totalorder %s29, 0
      %p176 = por %p174, %p175
      %p177 = scmp.ne.s32.totalorder %s165, %s166
      %p178 = scmp.eq.s32.totalorder %s30, 1
      %p179 = por %p177, %p178
      %p181 = scmp.ne.s32.totalorder %s166, %s180
      %p182 = scmp.eq.s32.totalorder %s30, 0
      %p183 = por %p181, %p182
      %s185 = sadd.s32 %s184, 1
      %p188 = scmp.eq.s32.totalorder %s24, 1
      %p189 = scmp.ne.s32.totalorder %s184, %s186
      %p190 = scmp.eq.s32.totalorder %s24, 0
      %p191 = por %p189, %p190
      %p192 = scmp.ne.s32.totalorder %s184, %s186
      %p193 = scmp.eq.s32.totalorder %s29, 1
      %p194 = por %p192, %p193
      %p195 = scmp.ne.s32.totalorder %s186, %s187
      %p196 = scmp.eq.s32.totalorder %s29, 0
      %p197 = por %p195, %p196
      %p198 = scmp.ne.s32.totalorder %s186, %s187
      %p199 = scmp.eq.s32.totalorder %s30, 1
      %p200 = por %p198, %p199
      %p202 = scmp.ne.s32.totalorder %s187, %s201
      %p203 = scmp.eq.s32.totalorder %s30, 0
      %p204 = por %p202, %p203
      %s206 = sadd.s32 %s205, 1
      %p209 = scmp.eq.s32.totalorder %s24, 1
      %p210 = scmp.ne.s32.totalorder %s205, %s207
      %p211 = scmp.eq.s32.totalorder %s24, 0
      %p212 = por %p210, %p211
      %p213 = scmp.ne.s32.totalorder %s205, %s207
      %p214 = scmp.eq.s32.totalorder %s29, 1
      %p215 = por %p213, %p214
      %p216 = scmp.ne.s32.totalorder %s207, %s208
      %p217 = scmp.eq.s32.totalorder %s29, 0
      %p218 = por %p216, %p217
      %p219 = scmp.ne.s32.totalorder %s207, %s208
      %p220 = scmp.eq.s32.totalorder %s30, 1
      %p221 = por %p219, %p220
      %p223 = scmp.ne.s32.totalorder %s208, %s222
      %p224 = scmp.eq.s32.totalorder %s30, 0
      %p225 = por %p223, %p224
      %s227 = sadd.s32 %s226, 1
      %p230 = scmp.eq.s32.totalorder %s24, 1
      %p231 = scmp.ne.s32.totalorder %s226, %s228
      %p232 = scmp.eq.s32.totalorder %s24, 0
      %p233 = por %p231, %p232
      %p234 = scmp.ne.s32.totalorder %s226, %s228
      %p235 = scmp.eq.s32.totalorder %s29, 1
      %p236 = por %p234, %p235
      %p237 = scmp.ne.s32.totalorder %s228, %s229
      %p238 = scmp.eq.s32.totalorder %s29, 0
      %p239 = por %p237, %p238
      %p240 = scmp.ne.s32.totalorder %s228, %s229
      %p241 = scmp.eq.s32.totalorder %s30, 1
      %p242 = por %p240, %p241
      %p244 = scmp.ne.s32.totalorder %s229, %s243
      %p245 = scmp.eq.s32.totalorder %s30, 0
      %p246 = por %p244, %p245
      %s248 = sadd.s32 %s247, 1
      %p251 = scmp.eq.s32.totalorder %s24, 1
      %p252 = scmp.ne.s32.totalorder %s247, %s249
      %p253 = scmp.eq.s32.totalorder %s24, 0
      %p254 = por %p252, %p253
      %p255 = scmp.ne.s32.totalorder %s247, %s249
      %p256 = scmp.eq.s32.totalorder %s29, 1
      %p257 = por %p255, %p256
      %p258 = scmp.ne.s32.totalorder %s249, %s250
      %p259 = scmp.eq.s32.totalorder %s29, 0
      %p260 = por %p258, %p259
      %p261 = scmp.ne.s32.totalorder %s249, %s250
      %p262 = scmp.eq.s32.totalorder %s30, 1
      %p263 = por %p261, %p262
      %p265 = scmp.ne.s32.totalorder %s250, %s264
      %p266 = scmp.eq.s32.totalorder %s30, 0
      %p267 = por %p265, %p266
      %s269 = sadd.s32 %s268, 1
      %p272 = scmp.eq.s32.totalorder %s24, 1
      %p273 = scmp.ne.s32.totalorder %s268, %s270
      %p274 = scmp.eq.s32.totalorder %s24, 0
      %p275 = por %p273, %p274
      %p276 = scmp.ne.s32.totalorder %s268, %s270
      %p277 = scmp.eq.s32.totalorder %s29, 1
      %p278 = por %p276, %p277
      %p279 = scmp.ne.s32.totalorder %s270, %s271
      %p280 = scmp.eq.s32.totalorder %s29, 0
      %p281 = por %p279, %p280
      %p282 = scmp.ne.s32.totalorder %s270, %s271
      %p283 = scmp.eq.s32.totalorder %s30, 1
      %p284 = por %p282, %p283
      %p286 = scmp.ne.s32.totalorder %s271, %s285
      %p287 = scmp.eq.s32.totalorder %s30, 0
      %p288 = por %p286, %p287
      %s290 = sadd.s32 %s289, 1
      %p293 = scmp.eq.s32.totalorder %s24, 1
      %p294 = scmp.ne.s32.totalorder %s289, %s291
      %p295 = scmp.eq.s32.totalorder %s24, 0
      %p296 = por %p294, %p295
      %p297 = scmp.ne.s32.totalorder %s289, %s291
      %p298 = scmp.eq.s32.totalorder %s29, 1
      %p299 = por %p297, %p298
      %p300 = scmp.ne.s32.totalorder %s291, %s292
      %p301 = scmp.eq.s32.totalorder %s29, 0
      %p302 = por %p300, %p301
      %p303 = scmp.ne.s32.totalorder %s291, %s292
      %p304 = scmp.eq.s32.totalorder %s30, 1
      %p305 = por %p303, %p304
      %p307 = scmp.ne.s32.totalorder %s292, %s306
      %p308 = scmp.eq.s32.totalorder %s30, 0
      %p309 = por %p307, %p308
      %s311 = sadd.s32 %s310, 1
      %p314 = scmp.eq.s32.totalorder %s24, 1
      %p315 = scmp.ne.s32.totalorder %s310, %s312
      %p316 = scmp.eq.s32.totalorder %s24, 0
      %p317 = por %p315, %p316
      %p318 = scmp.ne.s32.totalorder %s310, %s312
      %p319 = scmp.eq.s32.totalorder %s29, 1
      %p320 = por %p318, %p319
      %p321 = scmp.ne.s32.totalorder %s312, %s313
      %p322 = scmp.eq.s32.totalorder %s29, 0
      %p323 = por %p321, %p322
      %p324 = scmp.ne.s32.totalorder %s312, %s313
      %p325 = scmp.eq.s32.totalorder %s30, 1
      %p326 = por %p324, %p325
      %p328 = scmp.ne.s32.totalorder %s313, %s327
      %p329 = scmp.eq.s32.totalorder %s30, 0
      %p330 = por %p328, %p329
      %s332 = sadd.s32 %s331, 1
      %p335 = scmp.eq.s32.totalorder %s24, 1
      %p336 = scmp.ne.s32.totalorder %s331, %s333
      %p337 = scmp.eq.s32.totalorder %s24, 0
      %p338 = por %p336, %p337
      %p339 = scmp.ne.s32.totalorder %s331, %s333
      %p340 = scmp.eq.s32.totalorder %s29, 1
      %p341 = por %p339, %p340
      %p342 = scmp.ne.s32.totalorder %s333, %s334
      %p343 = scmp.eq.s32.totalorder %s29, 0
      %p344 = por %p342, %p343
      %p345 = scmp.ne.s32.totalorder %s333, %s334
      %p346 = scmp.eq.s32.totalorder %s30, 1
      %p347 = por %p345, %p346
      %p349 = scmp.ne.s32.totalorder %s334, %s348
      %p350 = scmp.eq.s32.totalorder %s30, 0
      %p351 = por %p349, %p350
      %s352 = ssub.s32 %s24, %s31
      %p353 = scmp.eq.s32.totalorder %s352, 0
      %s355 = sadd.s32 %s354, 1
      %s356 = scalar_select %p353, %s354, %s355
      %p359 = pneg %p353
      %p360 = scmp.eq.s32.totalorder %s24, 1
      %p361 = por %p359, %p360
      %p362 = scmp.ne.s32.totalorder %s354, %s357
      %p363 = scmp.eq.s32.totalorder %s24, 0
      %p364 = por %p362, %p363
      %p365 = scmp.ne.s32.totalorder %s354, %s357
      %p366 = scmp.eq.s32.totalorder %s29, 1
      %p367 = por %p365, %p366
      %p368 = scmp.ne.s32.totalorder %s357, %s358
      %p369 = scmp.eq.s32.totalorder %s29, 0
      %p370 = por %p368, %p369
      %p371 = scmp.ne.s32.totalorder %s357, %s358
      %p372 = scmp.eq.s32.totalorder %s30, 1
      %p373 = por %p371, %p372
      %p375 = scmp.ne.s32.totalorder %s358, %s374
      %p376 = scmp.eq.s32.totalorder %s30, 0
      %p377 = por %p375, %p376
      %p378 = scmp.le.s32.totalorder 1, %s24
      %p379 = scmp.lt.s32.totalorder %s24, 3
      %p380 = pnand %p378, %p379
      %p381 = pneg %p380
      // Predicated region
      $region9: #{tpu_custom_call.1} parent=5 // pred_check
        _
      $region10: #{tpu_custom_call.1} parent=5 // pred_check_branch
        %383 = sbr.rel (%p380) target = $region12
      $region11: #{tpu_custom_call.1} parent=5 // pred_region
        %s384 = ssub.s32 %s24, 1
        // Predicated region
        $region13: #{tpu_custom_call.1} parent=11 // pred_check
          %p385 = pneg %p71
        $region14: #{tpu_custom_call.1} parent=11 // pred_check_branch
          %387 = sbr.rel (%p385) target = $region16
        $region15: #{tpu_custom_call.1} parent=11 // pred_region
          _
        $region16: #{tpu_custom_call.1} parent=11 // pred_fallthru
          _
        // Predicated region
        $region17: #{tpu_custom_call.1} parent=11 // pred_check
          %p388 = pneg %p92
        $region18: #{tpu_custom_call.1} parent=11 // pred_check_branch
          %390 = sbr.rel (%p388) target = $region20
        $region19: #{tpu_custom_call.1} parent=11 // pred_region
          _
        $region20: #{tpu_custom_call.1} parent=11 // pred_fallthru
          _
        // Predicated region
        $region21: #{tpu_custom_call.1} parent=11 // pred_check
          %p391 = pneg %p113
        $region22: #{tpu_custom_call.1} parent=11 // pred_check_branch
          %393 = sbr.rel (%p391) target = $region24
        $region23: #{tpu_custom_call.1} parent=11 // pred_region
          _
        $region24: #{tpu_custom_call.1} parent=11 // pred_fallthru
          _
        // Predicated region
        $region25: #{tpu_custom_call.1} parent=11 // pred_check
          %p394 = pneg %p134
        $region26: #{tpu_custom_call.1} parent=11 // pred_check_branch
          %396 = sbr.rel (%p394) target = $region28
        $region27: #{tpu_custom_call.1} parent=11 // pred_region
          _
        $region28: #{tpu_custom_call.1} parent=11 // pred_fallthru
          _
        // Predicated region
        $region29: #{tpu_custom_call.1} parent=11 // pred_check
          %p397 = pneg %p155
        $region30: #{tpu_custom_call.1} parent=11 // pred_check_branch
          %399 = sbr.rel (%p397) target = $region32
        $region31: #{tpu_custom_call.1} parent=11 // pred_region
          _
        $region32: #{tpu_custom_call.1} parent=11 // pred_fallthru
          _
        // Predicated region
        $region33: #{tpu_custom_call.1} parent=11 // pred_check
          %p400 = pneg %p176
        $region34: #{tpu_custom_call.1} parent=11 // pred_check_branch
          %402 = sbr.rel (%p400) target = $region36
        $region35: #{tpu_custom_call.1} parent=11 // pred_region
          _
        $region36: #{tpu_custom_call.1} parent=11 // pred_fallthru
          _
        // Predicated region
        $region37: #{tpu_custom_call.1} parent=11 // pred_check
          %p403 = pneg %p197
        $region38: #{tpu_custom_call.1} parent=11 // pred_check_branch
          %405 = sbr.rel (%p403) target = $region40
        $region39: #{tpu_custom_call.1} parent=11 // pred_region
          _
        $region40: #{tpu_custom_call.1} parent=11 // pred_fallthru
          _
        // Predicated region
        $region41: #{tpu_custom_call.1} parent=11 // pred_check
          %p406 = pneg %p218
        $region42: #{tpu_custom_call.1} parent=11 // pred_check_branch
          %408 = sbr.rel (%p406) target = $region44
        $region43: #{tpu_custom_call.1} parent=11 // pred_region
          _
        $region44: #{tpu_custom_call.1} parent=11 // pred_fallthru
          _
        // Predicated region
        $region45: #{tpu_custom_call.1} parent=11 // pred_check
          %p409 = pneg %p239
        $region46: #{tpu_custom_call.1} parent=11 // pred_check_branch
          %411 = sbr.rel (%p409) target = $region48
        $region47: #{tpu_custom_call.1} parent=11 // pred_region
          _
        $region48: #{tpu_custom_call.1} parent=11 // pred_fallthru
          _
        // Predicated region
        $region49: #{tpu_custom_call.1} parent=11 // pred_check
          %p412 = pneg %p260
        $region50: #{tpu_custom_call.1} parent=11 // pred_check_branch
          %414 = sbr.rel (%p412) target = $region52
        $region51: #{tpu_custom_call.1} parent=11 // pred_region
          _
        $region52: #{tpu_custom_call.1} parent=11 // pred_fallthru
          _
        // Predicated region
        $region53: #{tpu_custom_call.1} parent=11 // pred_check
          %p415 = pneg %p281
        $region54: #{tpu_custom_call.1} parent=11 // pred_check_branch
          %417 = sbr.rel (%p415) target = $region56
        $region55: #{tpu_custom_call.1} parent=11 // pred_region
          _
        $region56: #{tpu_custom_call.1} parent=11 // pred_fallthru
          _
        // Predicated region
        $region57: #{tpu_custom_call.1} parent=11 // pred_check
          %p418 = pneg %p302
        $region58: #{tpu_custom_call.1} parent=11 // pred_check_branch
          %420 = sbr.rel (%p418) target = $region60
        $region59: #{tpu_custom_call.1} parent=11 // pred_region
          _
        $region60: #{tpu_custom_call.1} parent=11 // pred_fallthru
          _
        // Predicated region
        $region61: #{tpu_custom_call.1} parent=11 // pred_check
          %p421 = pneg %p323
        $region62: #{tpu_custom_call.1} parent=11 // pred_check_branch
          %423 = sbr.rel (%p421) target = $region64
        $region63: #{tpu_custom_call.1} parent=11 // pred_region
          _
        $region64: #{tpu_custom_call.1} parent=11 // pred_fallthru
          _
        // Predicated region
        $region65: #{tpu_custom_call.1} parent=11 // pred_check
          %p424 = pneg %p344
        $region66: #{tpu_custom_call.1} parent=11 // pred_check_branch
          %426 = sbr.rel (%p424) target = $region68
        $region67: #{tpu_custom_call.1} parent=11 // pred_region
          _
        $region68: #{tpu_custom_call.1} parent=11 // pred_fallthru
          _
      $region12: #{tpu_custom_call.1} parent=5 // pred_fallthru
        _
      %p427 = scmp.lt.s32.totalorder %s24, 2
      // Predicated region
      $region69: #{tpu_custom_call.1} parent=5 // pred_check
        %p428 = pneg %p427
      $region70: #{tpu_custom_call.1} parent=5 // pred_check_branch
        %430 = sbr.rel (%p428) target = $region72
      $region71: #{tpu_custom_call.1} parent=5 // pred_region
        // Predicated region
        $region73: #{tpu_custom_call.1} parent=71 // pred_check
          %p431 = pneg %p44
        $region74: #{tpu_custom_call.1} parent=71 // pred_check_branch
          %433 = sbr.rel (%p431) target = $region76
        $region75: #{tpu_custom_call.1} parent=71 // pred_region
          %s434 = smul.u32 16, %s24
          %p435 = scmp.lt.s32.totalorder %s434, 31
          %s436 = scalar_select %p435, %s434, 31
          %s437 = smul.addr %s436, 8
          %s438 = scalar_lea.vmem %s0, %s437
          %s439 = smul.u32 16, %s24
        $region76: #{tpu_custom_call.1} parent=71 // pred_fallthru
          _
      $region72: #{tpu_custom_call.1} parent=5 // pred_fallthru
        _
      %p440 = scmp.le.s32.totalorder 1, %s24
      %p441 = scmp.lt.s32.totalorder %s24, 3
      %p442 = pnand %p440, %p441
      %p443 = pneg %p442
      // Predicated region
      $region77: #{tpu_custom_call.1} parent=5 // pred_check
        _
      $region78: #{tpu_custom_call.1} parent=5 // pred_check_branch
        %445 = sbr.rel (%p442) target = $region80
      $region79: #{tpu_custom_call.1} parent=5 // pred_region
        %s446 = ssub.s32 %s24, 1
        %s447 = smul.u32 16, %s29
        %p448 = scmp.lt.s32.totalorder %s447, 31
        %s449 = scalar_select %p448, %s447, 31
        %s450 = smul.addr %s449, 8
        %s451 = scalar_lea.vmem %s0, %s450
        %p452 = pneg %p50
        %p453 = pneg %p47
        %p454 = pneg %p71
        %p455 = pneg %p68
        %p456 = pneg %p92
        %p457 = pneg %p89
        %p458 = pneg %p113
        %p459 = pneg %p110
        %p460 = pneg %p134
        %p461 = pneg %p131
        %p462 = pneg %p155
        %p463 = pneg %p152
        %p464 = pneg %p176
        %p465 = pneg %p173
        %p466 = pneg %p197
        %p467 = pneg %p194
        %p468 = pneg %p218
        %p469 = pneg %p215
        %p470 = pneg %p239
        %p471 = pneg %p236
        %p472 = pneg %p260
        %p473 = pneg %p257
        %p474 = pneg %p281
        %p475 = pneg %p278
        %p476 = pneg %p302
        %p477 = pneg %p299
        %p478 = pneg %p323
        %p479 = pneg %p320
        %p480 = pneg %p344
        %p481 = pneg %p341
        %p482 = pneg %p370
        %p483 = pneg %p367
        %s484 = sand.u32 %s357, 1
        %s485 = scalar_lea.sflag [#allocation3], %s484
        %s486 = sand.u32 %s357, 1
        %s487 = smul.addr %s486, 128
        %s488 = scalar_lea.vmem [#allocation2], %s487
        %s489 = smul.u32 16, %s29
        %p490 = scmp.lt.s32.totalorder %s489, 31
        %s491 = scalar_select %p490, %s489, 31
        %s492 = smul.addr %s491, 8
        %s493 = scalar_lea.vmem %s0, %s492
        %s494 = smul.u32 16, %s29
        %s495 = smul.u32 16, %s29
        %v496 = vld [vmem:[%s493] sm:$0xff]
        %v497 = vld [vmem:[%s493 + $0x8] sm:$0xff]
        %v498 = vld [vmem:[%s493 + $0x10] sm:$0xff]
        %v499 = vld [vmem:[%s493 + $0x18] sm:$0xff]
        %v500 = vld [vmem:[%s493 + $0x20] sm:$0xff]
        %v501 = vld [vmem:[%s493 + $0x28] sm:$0xff]
        %v502 = vld [vmem:[%s493 + $0x30] sm:$0xff]
        %v503 = vld [vmem:[%s493 + $0x38] sm:$0xff]
        %v504 = vld [vmem:[%s493 + $0x40] sm:$0xff]
        %v505 = vld [vmem:[%s493 + $0x48] sm:$0xff]
        %v506 = vld [vmem:[%s493 + $0x50] sm:$0xff]
        %v507 = vld [vmem:[%s493 + $0x58] sm:$0xff]
        %v508 = vld [vmem:[%s493 + $0x60] sm:$0xff]
        %v509 = vld [vmem:[%s493 + $0x68] sm:$0xff]
        %v510 = vld [vmem:[%s493 + $0x70] sm:$0xff]
        %v511 = vld [vmem:[%s493 + $0x78] sm:$0xff]
        %v512 = vld [vmem:[%s1] sm:$0x1]
        %v513 = vld [vmem:[%s2] sm:$0x1]
        %vm514 = vcmask 261120
        %v515 = vsel %vm514, %v496, 0.0
        %516 = vadd.xlane.f32.xlu0 %v515
        %v517 = vpop.xlane.xlu0 %516
        %v518 = vsel %vm514, %v497, 0.0
        %519 = vadd.xlane.f32.xlu0 %v518
        %v520 = vpop.xlane.xlu0 %519
        %v521 = vsel %vm514, %v498, 0.0
        %522 = vadd.xlane.f32.xlu0 %v521
        %v523 = vpop.xlane.xlu0 %522
        %v524 = vsel %vm514, %v499, 0.0
        %525 = vadd.xlane.f32.xlu0 %v524
        %v526 = vpop.xlane.xlu0 %525
        %v527 = vsel %vm514, %v500, 0.0
        %528 = vadd.xlane.f32.xlu0 %v527
        %v529 = vpop.xlane.xlu0 %528
        %v530 = vsel %vm514, %v501, 0.0
        %531 = vadd.xlane.f32.xlu0 %v530
        %v532 = vpop.xlane.xlu0 %531
        %v533 = vsel %vm514, %v502, 0.0
        %534 = vadd.xlane.f32.xlu0 %v533
        %v535 = vpop.xlane.xlu0 %534
        %v536 = vsel %vm514, %v503, 0.0
        %537 = vadd.xlane.f32.xlu0 %v536
        %v538 = vpop.xlane.xlu0 %537
        %v539 = vsel %vm514, %v504, 0.0
        %540 = vadd.xlane.f32.xlu0 %v539
        %v541 = vpop.xlane.xlu0 %540
        %v542 = vsel %vm514, %v505, 0.0
        %543 = vadd.xlane.f32.xlu0 %v542
        %v544 = vpop.xlane.xlu0 %543
        %v545 = vsel %vm514, %v506, 0.0
        %546 = vadd.xlane.f32.xlu0 %v545
        %v547 = vpop.xlane.xlu0 %546
        %v548 = vsel %vm514, %v507, 0.0
        %549 = vadd.xlane.f32.xlu0 %v548
        %v550 = vpop.xlane.xlu0 %549
        %v551 = vsel %vm514, %v508, 0.0
        %552 = vadd.xlane.f32.xlu0 %v551
        %v553 = vpop.xlane.xlu0 %552
        %v554 = vsel %vm514, %v509, 0.0
        %555 = vadd.xlane.f32.xlu0 %v554
        %v556 = vpop.xlane.xlu0 %555
        %v557 = vsel %vm514, %v510, 0.0
        %558 = vadd.xlane.f32.xlu0 %v557
        %v559 = vpop.xlane.xlu0 %558
        %v560 = vsel %vm514, %v511, 0.0
        %561 = vadd.xlane.f32.xlu0 %v560
        %v562 = vpop.xlane.xlu0 %561
        %v563 = vmul.f32 %v517, 0.03125
        %v564 = vmul.f32 %v520, 0.03125
        %v565 = vmul.f32 %v523, 0.03125
        %v566 = vmul.f32 %v526, 0.03125
        %v567 = vmul.f32 %v529, 0.03125
        %v568 = vmul.f32 %v532, 0.03125
        %v569 = vmul.f32 %v535, 0.03125
        %v570 = vmul.f32 %v538, 0.03125
        %v571 = vmul.f32 %v541, 0.03125
        %v572 = vmul.f32 %v544, 0.03125
        %v573 = vmul.f32 %v547, 0.03125
        %v574 = vmul.f32 %v550, 0.03125
        %v575 = vmul.f32 %v553, 0.03125
        %v576 = vmul.f32 %v556, 0.03125
        %v577 = vmul.f32 %v559, 0.03125
        %v578 = vmul.f32 %v562, 0.03125
        %v579 = vmul.f32 %v496, %v496
        %v580 = vmul.f32 %v497, %v497
        %v581 = vmul.f32 %v498, %v498
        %v582 = vmul.f32 %v499, %v499
        %v583 = vmul.f32 %v500, %v500
        %v584 = vmul.f32 %v501, %v501
        %v585 = vmul.f32 %v502, %v502
        %v586 = vmul.f32 %v503, %v503
        %v587 = vmul.f32 %v504, %v504
        %v588 = vmul.f32 %v505, %v505
        %v589 = vmul.f32 %v506, %v506
        %v590 = vmul.f32 %v507, %v507
        %v591 = vmul.f32 %v508, %v508
        %v592 = vmul.f32 %v509, %v509
        %v593 = vmul.f32 %v510, %v510
        %v594 = vmul.f32 %v511, %v511
        %v595 = vsel %vm514, %v579, 0.0
        %596 = vadd.xlane.f32.xlu0 %v595
        %v597 = vpop.xlane.xlu0 %596
        %v598 = vsel %vm514, %v580, 0.0
        %599 = vadd.xlane.f32.xlu0 %v598
        %v600 = vpop.xlane.xlu0 %599
        %v601 = vsel %vm514, %v581, 0.0
        %602 = vadd.xlane.f32.xlu0 %v601
        %v603 = vpop.xlane.xlu0 %602
        %v604 = vsel %vm514, %v582, 0.0
        %605 = vadd.xlane.f32.xlu0 %v604
        %v606 = vpop.xlane.xlu0 %605
        %v607 = vsel %vm514, %v583, 0.0
        %608 = vadd.xlane.f32.xlu0 %v607
        %v609 = vpop.xlane.xlu0 %608
        %v610 = vsel %vm514, %v584, 0.0
        %611 = vadd.xlane.f32.xlu0 %v610
        %v612 = vpop.xlane.xlu0 %611
        %v613 = vsel %vm514, %v585, 0.0
        %614 = vadd.xlane.f32.xlu0 %v613
        %v615 = vpop.xlane.xlu0 %614
        %v616 = vsel %vm514, %v586, 0.0
        %617 = vadd.xlane.f32.xlu0 %v616
        %v618 = vpop.xlane.xlu0 %617
        %v619 = vsel %vm514, %v587, 0.0
        %620 = vadd.xlane.f32.xlu0 %v619
        %v621 = vpop.xlane.xlu0 %620
        %v622 = vsel %vm514, %v588, 0.0
        %623 = vadd.xlane.f32.xlu0 %v622
        %v624 = vpop.xlane.xlu0 %623
        %v625 = vsel %vm514, %v589, 0.0
        %626 = vadd.xlane.f32.xlu0 %v625
        %v627 = vpop.xlane.xlu0 %626
        %v628 = vsel %vm514, %v590, 0.0
        %629 = vadd.xlane.f32.xlu0 %v628
        %v630 = vpop.xlane.xlu0 %629
        %v631 = vsel %vm514, %v591, 0.0
        %632 = vadd.xlane.f32.xlu0 %v631
        %v633 = vpop.xlane.xlu0 %632
        %v634 = vsel %vm514, %v592, 0.0
        %635 = vadd.xlane.f32.xlu0 %v634
        %v636 = vpop.xlane.xlu0 %635
        %v637 = vsel %vm514, %v593, 0.0
        %638 = vadd.xlane.f32.xlu0 %v637
        %v639 = vpop.xlane.xlu0 %638
        %v640 = vsel %vm514, %v594, 0.0
        %641 = vadd.xlane.f32.xlu0 %v640
        %v642 = vpop.xlane.xlu0 %641
        %v643 = vmul.f32 %v597, 0.03125
        %v644 = vmul.f32 %v600, 0.03125
        %v645 = vmul.f32 %v603, 0.03125
        %v646 = vmul.f32 %v606, 0.03125
        %v647 = vmul.f32 %v609, 0.03125
        %v648 = vmul.f32 %v612, 0.03125
        %v649 = vmul.f32 %v615, 0.03125
        %v650 = vmul.f32 %v618, 0.03125
        %v651 = vmul.f32 %v621, 0.03125
        %v652 = vmul.f32 %v624, 0.03125
        %v653 = vmul.f32 %v627, 0.03125
        %v654 = vmul.f32 %v630, 0.03125
        %v655 = vmul.f32 %v633, 0.03125
        %v656 = vmul.f32 %v636, 0.03125
        %v657 = vmul.f32 %v639, 0.03125
        %v658 = vmul.f32 %v642, 0.03125
        %v659 = vmul.f32 %v563, %v563
        %v660 = vmul.f32 %v564, %v564
        %v661 = vmul.f32 %v565, %v565
        %v662 = vmul.f32 %v566, %v566
        %v663 = vmul.f32 %v567, %v567
        %v664 = vmul.f32 %v568, %v568
        %v665 = vmul.f32 %v569, %v569
        %v666 = vmul.f32 %v570, %v570
        %v667 = vmul.f32 %v571, %v571
        %v668 = vmul.f32 %v572, %v572
        %v669 = vmul.f32 %v573, %v573
        %v670 = vmul.f32 %v574, %v574
        %v671 = vmul.f32 %v575, %v575
        %v672 = vmul.f32 %v576, %v576
        %v673 = vmul.f32 %v577, %v577
        %v674 = vmul.f32 %v578, %v578
        %v675 = vsub.f32 %v643, %v659
        %v676 = vsub.f32 %v644, %v660
        %v677 = vsub.f32 %v645, %v661
        %v678 = vsub.f32 %v646, %v662
        %v679 = vsub.f32 %v647, %v663
        %v680 = vsub.f32 %v648, %v664
        %v681 = vsub.f32 %v649, %v665
        %v682 = vsub.f32 %v650, %v666
        %v683 = vsub.f32 %v651, %v667
        %v684 = vsub.f32 %v652, %v668
        %v685 = vsub.f32 %v653, %v669
        %v686 = vsub.f32 %v654, %v670
        %v687 = vsub.f32 %v655, %v671
        %v688 = vsub.f32 %v656, %v672
        %v689 = vsub.f32 %v657, %v673
        %v690 = vsub.f32 %v658, %v674
        %v691 = vmax.f32 %v675, 0.0
        %v692 = vmax.f32 %v676, 0.0
        %v693 = vmax.f32 %v677, 0.0
        %v694 = vmax.f32 %v678, 0.0
        %v695 = vmax.f32 %v679, 0.0
        %v696 = vmax.f32 %v680, 0.0
        %v697 = vmax.f32 %v681, 0.0
        %v698 = vmax.f32 %v682, 0.0
        %v699 = vmax.f32 %v683, 0.0
        %v700 = vmax.f32 %v684, 0.0
        %v701 = vmax.f32 %v685, 0.0
        %v702 = vmax.f32 %v686, 0.0
        %v703 = vmax.f32 %v687, 0.0
        %v704 = vmax.f32 %v688, 0.0
        %v705 = vmax.f32 %v689, 0.0
        %v706 = vmax.f32 %v690, 0.0
        %v707 = vsub.f32 %v496, %v563
        %v708 = vsub.f32 %v497, %v564
        %v709 = vsub.f32 %v498, %v565
        %v710 = vsub.f32 %v499, %v566
        %v711 = vsub.f32 %v500, %v567
        %v712 = vsub.f32 %v501, %v568
        %v713 = vsub.f32 %v502, %v569
        %v714 = vsub.f32 %v503, %v570
        %v715 = vsub.f32 %v504, %v571
        %v716 = vsub.f32 %v505, %v572
        %v717 = vsub.f32 %v506, %v573
        %v718 = vsub.f32 %v507, %v574
        %v719 = vsub.f32 %v508, %v575
        %v720 = vsub.f32 %v509, %v576
        %v721 = vsub.f32 %v510, %v577
        %v722 = vsub.f32 %v511, %v578
        %v723 = vadd.f32 %v691, 1e-05
        %v724 = vadd.f32 %v692, 1e-05
        %v725 = vadd.f32 %v693, 1e-05
        %v726 = vadd.f32 %v694, 1e-05
        %v727 = vadd.f32 %v695, 1e-05
        %v728 = vadd.f32 %v696, 1e-05
        %v729 = vadd.f32 %v697, 1e-05
        %v730 = vadd.f32 %v698, 1e-05
        %v731 = vadd.f32 %v699, 1e-05
        %v732 = vadd.f32 %v700, 1e-05
        %v733 = vadd.f32 %v701, 1e-05
        %v734 = vadd.f32 %v702, 1e-05
        %v735 = vadd.f32 %v703, 1e-05
        %v736 = vadd.f32 %v704, 1e-05
        %v737 = vadd.f32 %v705, 1e-05
        %v738 = vadd.f32 %v706, 1e-05
        %v739 = vrsqrt.pop %v723
        %v740 = vmul.f32 %v739, %v723
        %v741 = vmul.f32 %v740, %v739
        %v742 = vmul.f32 0.5, %v741
        %v743 = vsub.f32 1.5, %v742
        %v744 = vmul.f32 %v739, %v743
        %vm745 = vweird.f32 %v723
        %vm746 = vweird.f32 %v739
        %vm747 = vmor %vm745, %vm746
        %v748 = vsel %vm747, %v739, %v744
        %v749 = vrsqrt.pop %v724
        %v750 = vmul.f32 %v749, %v724
        %v751 = vmul.f32 %v750, %v749
        %v752 = vmul.f32 0.5, %v751
        %v753 = vsub.f32 1.5, %v752
        %v754 = vmul.f32 %v749, %v753
        %vm755 = vweird.f32 %v724
        %vm756 = vweird.f32 %v749
        %vm757 = vmor %vm755, %vm756
        %v758 = vsel %vm757, %v749, %v754
        %v759 = vrsqrt.pop %v725
        %v760 = vmul.f32 %v759, %v725
        %v761 = vmul.f32 %v760, %v759
        %v762 = vmul.f32 0.5, %v761
        %v763 = vsub.f32 1.5, %v762
        %v764 = vmul.f32 %v759, %v763
        %vm765 = vweird.f32 %v725
        %vm766 = vweird.f32 %v759
        %vm767 = vmor %vm765, %vm766
        %v768 = vsel %vm767, %v759, %v764
        %v769 = vrsqrt.pop %v726
        %v770 = vmul.f32 %v769, %v726
        %v771 = vmul.f32 %v770, %v769
        %v772 = vmul.f32 0.5, %v771
        %v773 = vsub.f32 1.5, %v772
        %v774 = vmul.f32 %v769, %v773
        %vm775 = vweird.f32 %v726
        %vm776 = vweird.f32 %v769
        %vm777 = vmor %vm775, %vm776
        %v778 = vsel %vm777, %v769, %v774
        %v779 = vrsqrt.pop %v727
        %v780 = vmul.f32 %v779, %v727
        %v781 = vmul.f32 %v780, %v779
        %v782 = vmul.f32 0.5, %v781
        %v783 = vsub.f32 1.5, %v782
        %v784 = vmul.f32 %v779, %v783
        %vm785 = vweird.f32 %v727
        %vm786 = vweird.f32 %v779
        %vm787 = vmor %vm785, %vm786
        %v788 = vsel %vm787, %v779, %v784
        %v789 = vrsqrt.pop %v728
        %v790 = vmul.f32 %v789, %v728
        %v791 = vmul.f32 %v790, %v789
        %v792 = vmul.f32 0.5, %v791
        %v793 = vsub.f32 1.5, %v792
        %v794 = vmul.f32 %v789, %v793
        %vm795 = vweird.f32 %v728
        %vm796 = vweird.f32 %v789
        %vm797 = vmor %vm795, %vm796
        %v798 = vsel %vm797, %v789, %v794
        %v799 = vrsqrt.pop %v729
        %v800 = vmul.f32 %v799, %v729
        %v801 = vmul.f32 %v800, %v799
        %v802 = vmul.f32 0.5, %v801
        %v803 = vsub.f32 1.5, %v802
        %v804 = vmul.f32 %v799, %v803
        %vm805 = vweird.f32 %v729
        %vm806 = vweird.f32 %v799
        %vm807 = vmor %vm805, %vm806
        %v808 = vsel %vm807, %v799, %v804
        %v809 = vrsqrt.pop %v730
        %v810 = vmul.f32 %v809, %v730
        %v811 = vmul.f32 %v810, %v809
        %v812 = vmul.f32 0.5, %v811
        %v813 = vsub.f32 1.5, %v812
        %v814 = vmul.f32 %v809, %v813
        %vm815 = vweird.f32 %v730
        %vm816 = vweird.f32 %v809
        %vm817 = vmor %vm815, %vm816
        %v818 = vsel %vm817, %v809, %v814
        %v819 = vrsqrt.pop %v731
        %v820 = vmul.f32 %v819, %v731
        %v821 = vmul.f32 %v820, %v819
        %v822 = vmul.f32 0.5, %v821
        %v823 = vsub.f32 1.5, %v822
        %v824 = vmul.f32 %v819, %v823
        %vm825 = vweird.f32 %v731
        %vm826 = vweird.f32 %v819
        %vm827 = vmor %vm825, %vm826
        %v828 = vsel %vm827, %v819, %v824
        %v829 = vrsqrt.pop %v732
        %v830 = vmul.f32 %v829, %v732
        %v831 = vmul.f32 %v830, %v829
        %v832 = vmul.f32 0.5, %v831
        %v833 = vsub.f32 1.5, %v832
        %v834 = vmul.f32 %v829, %v833
        %vm835 = vweird.f32 %v732
        %vm836 = vweird.f32 %v829
        %vm837 = vmor %vm835, %vm836
        %v838 = vsel %vm837, %v829, %v834
        %v839 = vrsqrt.pop %v733
        %v840 = vmul.f32 %v839, %v733
        %v841 = vmul.f32 %v840, %v839
        %v842 = vmul.f32 0.5, %v841
        %v843 = vsub.f32 1.5, %v842
        %v844 = vmul.f32 %v839, %v843
        %vm845 = vweird.f32 %v733
        %vm846 = vweird.f32 %v839
        %vm847 = vmor %vm845, %vm846
        %v848 = vsel %vm847, %v839, %v844
        %v849 = vrsqrt.pop %v734
        %v850 = vmul.f32 %v849, %v734
        %v851 = vmul.f32 %v850, %v849
        %v852 = vmul.f32 0.5, %v851
        %v853 = vsub.f32 1.5, %v852
        %v854 = vmul.f32 %v849, %v853
        %vm855 = vweird.f32 %v734
        %vm856 = vweird.f32 %v849
        %vm857 = vmor %vm855, %vm856
        %v858 = vsel %vm857, %v849, %v854
        %v859 = vrsqrt.pop %v735
        %v860 = vmul.f32 %v859, %v735
        %v861 = vmul.f32 %v860, %v859
        %v862 = vmul.f32 0.5, %v861
        %v863 = vsub.f32 1.5, %v862
        %v864 = vmul.f32 %v859, %v863
        %vm865 = vweird.f32 %v735
        %vm866 = vweird.f32 %v859
        %vm867 = vmor %vm865, %vm866
        %v868 = vsel %vm867, %v859, %v864
        %v869 = vrsqrt.pop %v736
        %v870 = vmul.f32 %v869, %v736
        %v871 = vmul.f32 %v870, %v869
        %v872 = vmul.f32 0.5, %v871
        %v873 = vsub.f32 1.5, %v872
        %v874 = vmul.f32 %v869, %v873
        %vm875 = vweird.f32 %v736
        %vm876 = vweird.f32 %v869
        %vm877 = vmor %vm875, %vm876
        %v878 = vsel %vm877, %v869, %v874
        %v879 = vrsqrt.pop %v737
        %v880 = vmul.f32 %v879, %v737
        %v881 = vmul.f32 %v880, %v879
        %v882 = vmul.f32 0.5, %v881
        %v883 = vsub.f32 1.5, %v882
        %v884 = vmul.f32 %v879, %v883
        %vm885 = vweird.f32 %v737
        %vm886 = vweird.f32 %v879
        %vm887 = vmor %vm885, %vm886
        %v888 = vsel %vm887, %v879, %v884
        %v889 = vrsqrt.pop %v738
        %v890 = vmul.f32 %v889, %v738
        %v891 = vmul.f32 %v890, %v889
        %v892 = vmul.f32 0.5, %v891
        %v893 = vsub.f32 1.5, %v892
        %v894 = vmul.f32 %v889, %v893
        %vm895 = vweird.f32 %v738
        %vm896 = vweird.f32 %v889
        %vm897 = vmor %vm895, %vm896
        %v898 = vsel %vm897, %v889, %v894
        %v899 = vmul.f32 %v707, %v748
        %v900 = vmul.f32 %v708, %v758
        %v901 = vmul.f32 %v709, %v768
        %v902 = vmul.f32 %v710, %v778
        %v903 = vmul.f32 %v711, %v788
        %v904 = vmul.f32 %v712, %v798
        %v905 = vmul.f32 %v713, %v808
        %v906 = vmul.f32 %v714, %v818
        %v907 = vmul.f32 %v715, %v828
        %v908 = vmul.f32 %v716, %v838
        %v909 = vmul.f32 %v717, %v848
        %v910 = vmul.f32 %v718, %v858
        %v911 = vmul.f32 %v719, %v868
        %v912 = vmul.f32 %v720, %v878
        %v913 = vmul.f32 %v721, %v888
        %v914 = vmul.f32 %v722, %v898
        %v916 = vperm.slane %v512, 0
        %v918 = vmul.f32 %v899, %v916
        %v919 = vmul.f32 %v900, %v916
        %v920 = vmul.f32 %v901, %v916
        %v921 = vmul.f32 %v902, %v916
        %v922 = vmul.f32 %v903, %v916
        %v923 = vmul.f32 %v904, %v916
        %v924 = vmul.f32 %v905, %v916
        %v925 = vmul.f32 %v906, %v916
        %v926 = vmul.f32 %v907, %v916
        %v927 = vmul.f32 %v908, %v916
        %v928 = vmul.f32 %v909, %v916
        %v929 = vmul.f32 %v910, %v916
        %v930 = vmul.f32 %v911, %v916
        %v931 = vmul.f32 %v912, %v916
        %v932 = vmul.f32 %v913, %v916
        %v933 = vmul.f32 %v914, %v916
        %v935 = vperm.slane %v513, 0
        %v937 = vadd.f32 %v918, %v935
        %v938 = vadd.f32 %v919, %v935
        %v939 = vadd.f32 %v920, %v935
        %v940 = vadd.f32 %v921, %v935
        %v941 = vadd.f32 %v922, %v935
        %v942 = vadd.f32 %v923, %v935
        %v943 = vadd.f32 %v924, %v935
        %v944 = vadd.f32 %v925, %v935
        %v945 = vadd.f32 %v926, %v935
        %v946 = vadd.f32 %v927, %v935
        %v947 = vadd.f32 %v928, %v935
        %v948 = vadd.f32 %v929, %v935
        %v949 = vadd.f32 %v930, %v935
        %v950 = vadd.f32 %v931, %v935
        %v951 = vadd.f32 %v932, %v935
        %v952 = vadd.f32 %v933, %v935
        %v953 = vld [vmem:[%s3] sm:$0xff]
        %v954 = vld [vmem:[%s3 + $0x8] sm:$0xff]
        %v955 = vld [vmem:[%s3 + $0x10] sm:$0xff]
        %v956 = vld [vmem:[%s3 + $0x18] sm:$0xff]
        %v957 = vld [vmem:[%s4] sm:$0x1]
        %v959 = vperm.slane %v957, 0
        %v962 = vsel %vm514, %v937, 0
        %v965 = vsel %vm514, %v938, 0
        %v968 = vsel %vm514, %v939, 0
        %v971 = vsel %vm514, %v940, 0
        %v974 = vsel %vm514, %v941, 0
        %v977 = vsel %vm514, %v942, 0
        %v980 = vsel %vm514, %v943, 0
        %v983 = vsel %vm514, %v944, 0
        %v986 = vsel %vm514, %v945, 0
        %v989 = vsel %vm514, %v946, 0
        %v992 = vsel %vm514, %v947, 0
        %v995 = vsel %vm514, %v948, 0
        %v998 = vsel %vm514, %v949, 0
        %v1001 = vsel %vm514, %v950, 0
        %v1004 = vsel %vm514, %v951, 0
        %v1007 = vsel %vm514, %v952, 0
        %1009 = vmatpush.msra.mxu0 0.0
        %1010 = vmatpush.msra.mxu0 0.0
        %1011 = vmatpush.msra.mxu0 0.0
        %1012 = vmatpush.msra.mxu0 0.0
        %1013 = vmatpush.msra.mxu0 0.0
        %1014 = vmatpush.msra.mxu0 0.0
        %1015 = vmatpush.msra.mxu0 0.0
        %1016 = vmatpush.msra.mxu0 0.0
        %1017 = vmatpush.msra.mxu0 0.0
        %1018 = vmatpush.msra.mxu0 0.0
        %1019 = vmatpush.msra.mxu0 0.0
        %1020 = vmatpush.msra.mxu0 0.0
        %1021 = vmatpush.msra.mxu0 %v956
        %1022 = vmatpush.msra.mxu0 %v955
        %1023 = vmatpush.msra.mxu0 %v954
        %1024 = vmatpush.msra.mxu0 %v953
        %1025 = vmatmul.f32.gmra.mxu0 %v962
        %v1026 = vpop.f32.mrf.mxu0
        %v1027 = vadd.f32 %v959, %v1026
        %1028 = vmatmul.f32.gmra.mxu0 %v965
        %v1029 = vpop.f32.mrf.mxu0
        %v1030 = vadd.f32 %v959, %v1029
        %1031 = vmatmul.f32.gmra.mxu0 %v968
        %v1032 = vpop.f32.mrf.mxu0
        %v1033 = vadd.f32 %v959, %v1032
        %1034 = vmatmul.f32.gmra.mxu0 %v971
        %v1035 = vpop.f32.mrf.mxu0
        %v1036 = vadd.f32 %v959, %v1035
        %1037 = vmatmul.f32.gmra.mxu0 %v974
        %v1038 = vpop.f32.mrf.mxu0
        %v1039 = vadd.f32 %v959, %v1038
        %1040 = vmatmul.f32.gmra.mxu0 %v977
        %v1041 = vpop.f32.mrf.mxu0
        %v1042 = vadd.f32 %v959, %v1041
        %1043 = vmatmul.f32.gmra.mxu0 %v980
        %v1044 = vpop.f32.mrf.mxu0
        %v1045 = vadd.f32 %v959, %v1044
        %1046 = vmatmul.f32.gmra.mxu0 %v983
        %v1047 = vpop.f32.mrf.mxu0
        %v1048 = vadd.f32 %v959, %v1047
        %1049 = vmatmul.f32.gmra.mxu0 %v986
        %v1050 = vpop.f32.mrf.mxu0
        %v1051 = vadd.f32 %v959, %v1050
        %1052 = vmatmul.f32.gmra.mxu0 %v989
        %v1053 = vpop.f32.mrf.mxu0
        %v1054 = vadd.f32 %v959, %v1053
        %1055 = vmatmul.f32.gmra.mxu0 %v992
        %v1056 = vpop.f32.mrf.mxu0
        %v1057 = vadd.f32 %v959, %v1056
        %1058 = vmatmul.f32.gmra.mxu0 %v995
        %v1059 = vpop.f32.mrf.mxu0
        %v1060 = vadd.f32 %v959, %v1059
        %1061 = vmatmul.f32.gmra.mxu0 %v998
        %v1062 = vpop.f32.mrf.mxu0
        %v1063 = vadd.f32 %v959, %v1062
        %1064 = vmatmul.f32.gmra.mxu0 %v1001
        %v1065 = vpop.f32.mrf.mxu0
        %v1066 = vadd.f32 %v959, %v1065
        %1067 = vmatmul.f32.gmra.mxu0 %v1004
        %v1068 = vpop.f32.mrf.mxu0
        %v1069 = vadd.f32 %v959, %v1068
        %1070 = vmatmul.f32.gmra.mxu0 %v1007
        %v1071 = vpop.f32.mrf.mxu0
        %v1072 = vadd.f32 %v959, %v1071
        %1073 = vdwg.mxu0
        %v1074 = vtanh.pop %v1027
        %v1075 = vtanh.pop %v1030
        %v1076 = vtanh.pop %v1033
        %v1077 = vtanh.pop %v1036
        %v1078 = vtanh.pop %v1039
        %v1079 = vtanh.pop %v1042
        %v1080 = vtanh.pop %v1045
        %v1081 = vtanh.pop %v1048
        %v1082 = vtanh.pop %v1051
        %v1083 = vtanh.pop %v1054
        %v1084 = vtanh.pop %v1057
        %v1085 = vtanh.pop %v1060
        %v1086 = vtanh.pop %v1063
        %v1087 = vtanh.pop %v1066
        %v1088 = vtanh.pop %v1069
        %v1089 = vtanh.pop %v1072
        %v1090 = vld [vmem:[%s5] sm:$0x1]
        %v1091 = vld [vmem:[%s6] sm:$0x1]
        %v1092 = vsel %vm514, %v1074, 0.0
        %1093 = vadd.xlane.f32.xlu0 %v1092
        %v1094 = vpop.xlane.xlu0 %1093
        %v1095 = vsel %vm514, %v1075, 0.0
        %1096 = vadd.xlane.f32.xlu0 %v1095
        %v1097 = vpop.xlane.xlu0 %1096
        %v1098 = vsel %vm514, %v1076, 0.0
        %1099 = vadd.xlane.f32.xlu0 %v1098
        %v1100 = vpop.xlane.xlu0 %1099
        %v1101 = vsel %vm514, %v1077, 0.0
        %1102 = vadd.xlane.f32.xlu0 %v1101
        %v1103 = vpop.xlane.xlu0 %1102
        %v1104 = vsel %vm514, %v1078, 0.0
        %1105 = vadd.xlane.f32.xlu0 %v1104
        %v1106 = vpop.xlane.xlu0 %1105
        %v1107 = vsel %vm514, %v1079, 0.0
        %1108 = vadd.xlane.f32.xlu0 %v1107
        %v1109 = vpop.xlane.xlu0 %1108
        %v1110 = vsel %vm514, %v1080, 0.0
        %1111 = vadd.xlane.f32.xlu0 %v1110
        %v1112 = vpop.xlane.xlu0 %1111
        %v1113 = vsel %vm514, %v1081, 0.0
        %1114 = vadd.xlane.f32.xlu0 %v1113
        %v1115 = vpop.xlane.xlu0 %1114
        %v1116 = vsel %vm514, %v1082, 0.0
        %1117 = vadd.xlane.f32.xlu0 %v1116
        %v1118 = vpop.xlane.xlu0 %1117
        %v1119 = vsel %vm514, %v1083, 0.0
        %1120 = vadd.xlane.f32.xlu0 %v1119
        %v1121 = vpop.xlane.xlu0 %1120
        %v1122 = vsel %vm514, %v1084, 0.0
        %1123 = vadd.xlane.f32.xlu0 %v1122
        %v1124 = vpop.xlane.xlu0 %1123
        %v1125 = vsel %vm514, %v1085, 0.0
        %1126 = vadd.xlane.f32.xlu0 %v1125
        %v1127 = vpop.xlane.xlu0 %1126
        %v1128 = vsel %vm514, %v1086, 0.0
        %1129 = vadd.xlane.f32.xlu0 %v1128
        %v1130 = vpop.xlane.xlu0 %1129
        %v1131 = vsel %vm514, %v1087, 0.0
        %1132 = vadd.xlane.f32.xlu0 %v1131
        %v1133 = vpop.xlane.xlu0 %1132
        %v1134 = vsel %vm514, %v1088, 0.0
        %1135 = vadd.xlane.f32.xlu0 %v1134
        %v1136 = vpop.xlane.xlu0 %1135
        %v1137 = vsel %vm514, %v1089, 0.0
        %1138 = vadd.xlane.f32.xlu0 %v1137
        %v1139 = vpop.xlane.xlu0 %1138
        %v1140 = vmul.f32 %v1094, 0.03125
        %v1141 = vmul.f32 %v1097, 0.03125
        %v1142 = vmul.f32 %v1100, 0.03125
        %v1143 = vmul.f32 %v1103, 0.03125
        %v1144 = vmul.f32 %v1106, 0.03125
        %v1145 = vmul.f32 %v1109, 0.03125
        %v1146 = vmul.f32 %v1112, 0.03125
        %v1147 = vmul.f32 %v1115, 0.03125
        %v1148 = vmul.f32 %v1118, 0.03125
        %v1149 = vmul.f32 %v1121, 0.03125
        %v1150 = vmul.f32 %v1124, 0.03125
        %v1151 = vmul.f32 %v1127, 0.03125
        %v1152 = vmul.f32 %v1130, 0.03125
        %v1153 = vmul.f32 %v1133, 0.03125
        %v1154 = vmul.f32 %v1136, 0.03125
        %v1155 = vmul.f32 %v1139, 0.03125
        %v1156 = vmul.f32 %v1074, %v1074
        %v1157 = vmul.f32 %v1075, %v1075
        %v1158 = vmul.f32 %v1076, %v1076
        %v1159 = vmul.f32 %v1077, %v1077
        %v1160 = vmul.f32 %v1078, %v1078
        %v1161 = vmul.f32 %v1079, %v1079
        %v1162 = vmul.f32 %v1080, %v1080
        %v1163 = vmul.f32 %v1081, %v1081
        %v1164 = vmul.f32 %v1082, %v1082
        %v1165 = vmul.f32 %v1083, %v1083
        %v1166 = vmul.f32 %v1084, %v1084
        %v1167 = vmul.f32 %v1085, %v1085
        %v1168 = vmul.f32 %v1086, %v1086
        %v1169 = vmul.f32 %v1087, %v1087
        %v1170 = vmul.f32 %v1088, %v1088
        %v1171 = vmul.f32 %v1089, %v1089
        %v1172 = vsel %vm514, %v1156, 0.0
        %1173 = vadd.xlane.f32.xlu0 %v1172
        %v1174 = vpop.xlane.xlu0 %1173
        %v1175 = vsel %vm514, %v1157, 0.0
        %1176 = vadd.xlane.f32.xlu0 %v1175
        %v1177 = vpop.xlane.xlu0 %1176
        %v1178 = vsel %vm514, %v1158, 0.0
        %1179 = vadd.xlane.f32.xlu0 %v1178
        %v1180 = vpop.xlane.xlu0 %1179
        %v1181 = vsel %vm514, %v1159, 0.0
        %1182 = vadd.xlane.f32.xlu0 %v1181
        %v1183 = vpop.xlane.xlu0 %1182
        %v1184 = vsel %vm514, %v1160, 0.0
        %1185 = vadd.xlane.f32.xlu0 %v1184
        %v1186 = vpop.xlane.xlu0 %1185
        %v1187 = vsel %vm514, %v1161, 0.0
        %1188 = vadd.xlane.f32.xlu0 %v1187
        %v1189 = vpop.xlane.xlu0 %1188
        %v1190 = vsel %vm514, %v1162, 0.0
        %1191 = vadd.xlane.f32.xlu0 %v1190
        %v1192 = vpop.xlane.xlu0 %1191
        %v1193 = vsel %vm514, %v1163, 0.0
        %1194 = vadd.xlane.f32.xlu0 %v1193
        %v1195 = vpop.xlane.xlu0 %1194
        %v1196 = vsel %vm514, %v1164, 0.0
        %1197 = vadd.xlane.f32.xlu0 %v1196
        %v1198 = vpop.xlane.xlu0 %1197
        %v1199 = vsel %vm514, %v1165, 0.0
        %1200 = vadd.xlane.f32.xlu0 %v1199
        %v1201 = vpop.xlane.xlu0 %1200
        %v1202 = vsel %vm514, %v1166, 0.0
        %1203 = vadd.xlane.f32.xlu0 %v1202
        %v1204 = vpop.xlane.xlu0 %1203
        %v1205 = vsel %vm514, %v1167, 0.0
        %1206 = vadd.xlane.f32.xlu0 %v1205
        %v1207 = vpop.xlane.xlu0 %1206
        %v1208 = vsel %vm514, %v1168, 0.0
        %1209 = vadd.xlane.f32.xlu0 %v1208
        %v1210 = vpop.xlane.xlu0 %1209
        %v1211 = vsel %vm514, %v1169, 0.0
        %1212 = vadd.xlane.f32.xlu0 %v1211
        %v1213 = vpop.xlane.xlu0 %1212
        %v1214 = vsel %vm514, %v1170, 0.0
        %1215 = vadd.xlane.f32.xlu0 %v1214
        %v1216 = vpop.xlane.xlu0 %1215
        %v1217 = vsel %vm514, %v1171, 0.0
        %1218 = vadd.xlane.f32.xlu0 %v1217
        %v1219 = vpop.xlane.xlu0 %1218
        %v1220 = vmul.f32 %v1174, 0.03125
        %v1221 = vmul.f32 %v1177, 0.03125
        %v1222 = vmul.f32 %v1180, 0.03125
        %v1223 = vmul.f32 %v1183, 0.03125
        %v1224 = vmul.f32 %v1186, 0.03125
        %v1225 = vmul.f32 %v1189, 0.03125
        %v1226 = vmul.f32 %v1192, 0.03125
        %v1227 = vmul.f32 %v1195, 0.03125
        %v1228 = vmul.f32 %v1198, 0.03125
        %v1229 = vmul.f32 %v1201, 0.03125
        %v1230 = vmul.f32 %v1204, 0.03125
        %v1231 = vmul.f32 %v1207, 0.03125
        %v1232 = vmul.f32 %v1210, 0.03125
        %v1233 = vmul.f32 %v1213, 0.03125
        %v1234 = vmul.f32 %v1216, 0.03125
        %v1235 = vmul.f32 %v1219, 0.03125
        %v1236 = vmul.f32 %v1140, %v1140
        %v1237 = vmul.f32 %v1141, %v1141
        %v1238 = vmul.f32 %v1142, %v1142
        %v1239 = vmul.f32 %v1143, %v1143
        %v1240 = vmul.f32 %v1144, %v1144
        %v1241 = vmul.f32 %v1145, %v1145
        %v1242 = vmul.f32 %v1146, %v1146
        %v1243 = vmul.f32 %v1147, %v1147
        %v1244 = vmul.f32 %v1148, %v1148
        %v1245 = vmul.f32 %v1149, %v1149
        %v1246 = vmul.f32 %v1150, %v1150
        %v1247 = vmul.f32 %v1151, %v1151
        %v1248 = vmul.f32 %v1152, %v1152
        %v1249 = vmul.f32 %v1153, %v1153
        %v1250 = vmul.f32 %v1154, %v1154
        %v1251 = vmul.f32 %v1155, %v1155
        %v1252 = vsub.f32 %v1220, %v1236
        %v1253 = vsub.f32 %v1221, %v1237
        %v1254 = vsub.f32 %v1222, %v1238
        %v1255 = vsub.f32 %v1223, %v1239
        %v1256 = vsub.f32 %v1224, %v1240
        %v1257 = vsub.f32 %v1225, %v1241
        %v1258 = vsub.f32 %v1226, %v1242
        %v1259 = vsub.f32 %v1227, %v1243
        %v1260 = vsub.f32 %v1228, %v1244
        %v1261 = vsub.f32 %v1229, %v1245
        %v1262 = vsub.f32 %v1230, %v1246
        %v1263 = vsub.f32 %v1231, %v1247
        %v1264 = vsub.f32 %v1232, %v1248
        %v1265 = vsub.f32 %v1233, %v1249
        %v1266 = vsub.f32 %v1234, %v1250
        %v1267 = vsub.f32 %v1235, %v1251
        %v1268 = vmax.f32 %v1252, 0.0
        %v1269 = vmax.f32 %v1253, 0.0
        %v1270 = vmax.f32 %v1254, 0.0
        %v1271 = vmax.f32 %v1255, 0.0
        %v1272 = vmax.f32 %v1256, 0.0
        %v1273 = vmax.f32 %v1257, 0.0
        %v1274 = vmax.f32 %v1258, 0.0
        %v1275 = vmax.f32 %v1259, 0.0
        %v1276 = vmax.f32 %v1260, 0.0
        %v1277 = vmax.f32 %v1261, 0.0
        %v1278 = vmax.f32 %v1262, 0.0
        %v1279 = vmax.f32 %v1263, 0.0
        %v1280 = vmax.f32 %v1264, 0.0
        %v1281 = vmax.f32 %v1265, 0.0
        %v1282 = vmax.f32 %v1266, 0.0
        %v1283 = vmax.f32 %v1267, 0.0
        %v1284 = vsub.f32 %v1074, %v1140
        %v1285 = vsub.f32 %v1075, %v1141
        %v1286 = vsub.f32 %v1076, %v1142
        %v1287 = vsub.f32 %v1077, %v1143
        %v1288 = vsub.f32 %v1078, %v1144
        %v1289 = vsub.f32 %v1079, %v1145
        %v1290 = vsub.f32 %v1080, %v1146
        %v1291 = vsub.f32 %v1081, %v1147
        %v1292 = vsub.f32 %v1082, %v1148
        %v1293 = vsub.f32 %v1083, %v1149
        %v1294 = vsub.f32 %v1084, %v1150
        %v1295 = vsub.f32 %v1085, %v1151
        %v1296 = vsub.f32 %v1086, %v1152
        %v1297 = vsub.f32 %v1087, %v1153
        %v1298 = vsub.f32 %v1088, %v1154
        %v1299 = vsub.f32 %v1089, %v1155
        %v1300 = vadd.f32 %v1268, 1e-05
        %v1301 = vadd.f32 %v1269, 1e-05
        %v1302 = vadd.f32 %v1270, 1e-05
        %v1303 = vadd.f32 %v1271, 1e-05
        %v1304 = vadd.f32 %v1272, 1e-05
        %v1305 = vadd.f32 %v1273, 1e-05
        %v1306 = vadd.f32 %v1274, 1e-05
        %v1307 = vadd.f32 %v1275, 1e-05
        %v1308 = vadd.f32 %v1276, 1e-05
        %v1309 = vadd.f32 %v1277, 1e-05
        %v1310 = vadd.f32 %v1278, 1e-05
        %v1311 = vadd.f32 %v1279, 1e-05
        %v1312 = vadd.f32 %v1280, 1e-05
        %v1313 = vadd.f32 %v1281, 1e-05
        %v1314 = vadd.f32 %v1282, 1e-05
        %v1315 = vadd.f32 %v1283, 1e-05
        %v1316 = vrsqrt.pop %v1300
        %v1317 = vmul.f32 %v1316, %v1300
        %v1318 = vmul.f32 %v1317, %v1316
        %v1319 = vmul.f32 0.5, %v1318
        %v1320 = vsub.f32 1.5, %v1319
        %v1321 = vmul.f32 %v1316, %v1320
        %vm1322 = vweird.f32 %v1300
        %vm1323 = vweird.f32 %v1316
        %vm1324 = vmor %vm1322, %vm1323
        %v1325 = vsel %vm1324, %v1316, %v1321
        %v1326 = vrsqrt.pop %v1301
        %v1327 = vmul.f32 %v1326, %v1301
        %v1328 = vmul.f32 %v1327, %v1326
        %v1329 = vmul.f32 0.5, %v1328
        %v1330 = vsub.f32 1.5, %v1329
        %v1331 = vmul.f32 %v1326, %v1330
        %vm1332 = vweird.f32 %v1301
        %vm1333 = vweird.f32 %v1326
        %vm1334 = vmor %vm1332, %vm1333
        %v1335 = vsel %vm1334, %v1326, %v1331
        %v1336 = vrsqrt.pop %v1302
        %v1337 = vmul.f32 %v1336, %v1302
        %v1338 = vmul.f32 %v1337, %v1336
        %v1339 = vmul.f32 0.5, %v1338
        %v1340 = vsub.f32 1.5, %v1339
        %v1341 = vmul.f32 %v1336, %v1340
        %vm1342 = vweird.f32 %v1302
        %vm1343 = vweird.f32 %v1336
        %vm1344 = vmor %vm1342, %vm1343
        %v1345 = vsel %vm1344, %v1336, %v1341
        %v1346 = vrsqrt.pop %v1303
        %v1347 = vmul.f32 %v1346, %v1303
        %v1348 = vmul.f32 %v1347, %v1346
        %v1349 = vmul.f32 0.5, %v1348
        %v1350 = vsub.f32 1.5, %v1349
        %v1351 = vmul.f32 %v1346, %v1350
        %vm1352 = vweird.f32 %v1303
        %vm1353 = vweird.f32 %v1346
        %vm1354 = vmor %vm1352, %vm1353
        %v1355 = vsel %vm1354, %v1346, %v1351
        %v1356 = vrsqrt.pop %v1304
        %v1357 = vmul.f32 %v1356, %v1304
        %v1358 = vmul.f32 %v1357, %v1356
        %v1359 = vmul.f32 0.5, %v1358
        %v1360 = vsub.f32 1.5, %v1359
        %v1361 = vmul.f32 %v1356, %v1360
        %vm1362 = vweird.f32 %v1304
        %vm1363 = vweird.f32 %v1356
        %vm1364 = vmor %vm1362, %vm1363
        %v1365 = vsel %vm1364, %v1356, %v1361
        %v1366 = vrsqrt.pop %v1305
        %v1367 = vmul.f32 %v1366, %v1305
        %v1368 = vmul.f32 %v1367, %v1366
        %v1369 = vmul.f32 0.5, %v1368
        %v1370 = vsub.f32 1.5, %v1369
        %v1371 = vmul.f32 %v1366, %v1370
        %vm1372 = vweird.f32 %v1305
        %vm1373 = vweird.f32 %v1366
        %vm1374 = vmor %vm1372, %vm1373
        %v1375 = vsel %vm1374, %v1366, %v1371
        %v1376 = vrsqrt.pop %v1306
        %v1377 = vmul.f32 %v1376, %v1306
        %v1378 = vmul.f32 %v1377, %v1376
        %v1379 = vmul.f32 0.5, %v1378
        %v1380 = vsub.f32 1.5, %v1379
        %v1381 = vmul.f32 %v1376, %v1380
        %vm1382 = vweird.f32 %v1306
        %vm1383 = vweird.f32 %v1376
        %vm1384 = vmor %vm1382, %vm1383
        %v1385 = vsel %vm1384, %v1376, %v1381
        %v1386 = vrsqrt.pop %v1307
        %v1387 = vmul.f32 %v1386, %v1307
        %v1388 = vmul.f32 %v1387, %v1386
        %v1389 = vmul.f32 0.5, %v1388
        %v1390 = vsub.f32 1.5, %v1389
        %v1391 = vmul.f32 %v1386, %v1390
        %vm1392 = vweird.f32 %v1307
        %vm1393 = vweird.f32 %v1386
        %vm1394 = vmor %vm1392, %vm1393
        %v1395 = vsel %vm1394, %v1386, %v1391
        %v1396 = vrsqrt.pop %v1308
        %v1397 = vmul.f32 %v1396, %v1308
        %v1398 = vmul.f32 %v1397, %v1396
        %v1399 = vmul.f32 0.5, %v1398
        %v1400 = vsub.f32 1.5, %v1399
        %v1401 = vmul.f32 %v1396, %v1400
        %vm1402 = vweird.f32 %v1308
        %vm1403 = vweird.f32 %v1396
        %vm1404 = vmor %vm1402, %vm1403
        %v1405 = vsel %vm1404, %v1396, %v1401
        %v1406 = vrsqrt.pop %v1309
        %v1407 = vmul.f32 %v1406, %v1309
        %v1408 = vmul.f32 %v1407, %v1406
        %v1409 = vmul.f32 0.5, %v1408
        %v1410 = vsub.f32 1.5, %v1409
        %v1411 = vmul.f32 %v1406, %v1410
        %vm1412 = vweird.f32 %v1309
        %vm1413 = vweird.f32 %v1406
        %vm1414 = vmor %vm1412, %vm1413
        %v1415 = vsel %vm1414, %v1406, %v1411
        %v1416 = vrsqrt.pop %v1310
        %v1417 = vmul.f32 %v1416, %v1310
        %v1418 = vmul.f32 %v1417, %v1416
        %v1419 = vmul.f32 0.5, %v1418
        %v1420 = vsub.f32 1.5, %v1419
        %v1421 = vmul.f32 %v1416, %v1420
        %vm1422 = vweird.f32 %v1310
        %vm1423 = vweird.f32 %v1416
        %vm1424 = vmor %vm1422, %vm1423
        %v1425 = vsel %vm1424, %v1416, %v1421
        %v1426 = vrsqrt.pop %v1311
        %v1427 = vmul.f32 %v1426, %v1311
        %v1428 = vmul.f32 %v1427, %v1426
        %v1429 = vmul.f32 0.5, %v1428
        %v1430 = vsub.f32 1.5, %v1429
        %v1431 = vmul.f32 %v1426, %v1430
        %vm1432 = vweird.f32 %v1311
        %vm1433 = vweird.f32 %v1426
        %vm1434 = vmor %vm1432, %vm1433
        %v1435 = vsel %vm1434, %v1426, %v1431
        %v1436 = vrsqrt.pop %v1312
        %v1437 = vmul.f32 %v1436, %v1312
        %v1438 = vmul.f32 %v1437, %v1436
        %v1439 = vmul.f32 0.5, %v1438
        %v1440 = vsub.f32 1.5, %v1439
        %v1441 = vmul.f32 %v1436, %v1440
        %vm1442 = vweird.f32 %v1312
        %vm1443 = vweird.f32 %v1436
        %vm1444 = vmor %vm1442, %vm1443
        %v1445 = vsel %vm1444, %v1436, %v1441
        %v1446 = vrsqrt.pop %v1313
        %v1447 = vmul.f32 %v1446, %v1313
        %v1448 = vmul.f32 %v1447, %v1446
        %v1449 = vmul.f32 0.5, %v1448
        %v1450 = vsub.f32 1.5, %v1449
        %v1451 = vmul.f32 %v1446, %v1450
        %vm1452 = vweird.f32 %v1313
        %vm1453 = vweird.f32 %v1446
        %vm1454 = vmor %vm1452, %vm1453
        %v1455 = vsel %vm1454, %v1446, %v1451
        %v1456 = vrsqrt.pop %v1314
        %v1457 = vmul.f32 %v1456, %v1314
        %v1458 = vmul.f32 %v1457, %v1456
        %v1459 = vmul.f32 0.5, %v1458
        %v1460 = vsub.f32 1.5, %v1459
        %v1461 = vmul.f32 %v1456, %v1460
        %vm1462 = vweird.f32 %v1314
        %vm1463 = vweird.f32 %v1456
        %vm1464 = vmor %vm1462, %vm1463
        %v1465 = vsel %vm1464, %v1456, %v1461
        %v1466 = vrsqrt.pop %v1315
        %v1467 = vmul.f32 %v1466, %v1315
        %v1468 = vmul.f32 %v1467, %v1466
        %v1469 = vmul.f32 0.5, %v1468
        %v1470 = vsub.f32 1.5, %v1469
        %v1471 = vmul.f32 %v1466, %v1470
        %vm1472 = vweird.f32 %v1315
        %vm1473 = vweird.f32 %v1466
        %vm1474 = vmor %vm1472, %vm1473
        %v1475 = vsel %vm1474, %v1466, %v1471
        %v1476 = vmul.f32 %v1284, %v1325
        %v1477 = vmul.f32 %v1285, %v1335
        %v1478 = vmul.f32 %v1286, %v1345
        %v1479 = vmul.f32 %v1287, %v1355
        %v1480 = vmul.f32 %v1288, %v1365
        %v1481 = vmul.f32 %v1289, %v1375
        %v1482 = vmul.f32 %v1290, %v1385
        %v1483 = vmul.f32 %v1291, %v1395
        %v1484 = vmul.f32 %v1292, %v1405
        %v1485 = vmul.f32 %v1293, %v1415
        %v1486 = vmul.f32 %v1294, %v1425
        %v1487 = vmul.f32 %v1295, %v1435
        %v1488 = vmul.f32 %v1296, %v1445
        %v1489 = vmul.f32 %v1297, %v1455
        %v1490 = vmul.f32 %v1298, %v1465
        %v1491 = vmul.f32 %v1299, %v1475
        %v1493 = vperm.slane %v1090, 0
        %v1495 = vmul.f32 %v1476, %v1493
        %v1496 = vmul.f32 %v1477, %v1493
        %v1497 = vmul.f32 %v1478, %v1493
        %v1498 = vmul.f32 %v1479, %v1493
        %v1499 = vmul.f32 %v1480, %v1493
        %v1500 = vmul.f32 %v1481, %v1493
        %v1501 = vmul.f32 %v1482, %v1493
        %v1502 = vmul.f32 %v1483, %v1493
        %v1503 = vmul.f32 %v1484, %v1493
        %v1504 = vmul.f32 %v1485, %v1493
        %v1505 = vmul.f32 %v1486, %v1493
        %v1506 = vmul.f32 %v1487, %v1493
        %v1507 = vmul.f32 %v1488, %v1493
        %v1508 = vmul.f32 %v1489, %v1493
        %v1509 = vmul.f32 %v1490, %v1493
        %v1510 = vmul.f32 %v1491, %v1493
        %v1512 = vperm.slane %v1091, 0
        %v1514 = vadd.f32 %v1495, %v1512
        %v1515 = vadd.f32 %v1496, %v1512
        %v1516 = vadd.f32 %v1497, %v1512
        %v1517 = vadd.f32 %v1498, %v1512
        %v1518 = vadd.f32 %v1499, %v1512
        %v1519 = vadd.f32 %v1500, %v1512
        %v1520 = vadd.f32 %v1501, %v1512
        %v1521 = vadd.f32 %v1502, %v1512
        %v1522 = vadd.f32 %v1503, %v1512
        %v1523 = vadd.f32 %v1504, %v1512
        %v1524 = vadd.f32 %v1505, %v1512
        %v1525 = vadd.f32 %v1506, %v1512
        %v1526 = vadd.f32 %v1507, %v1512
        %v1527 = vadd.f32 %v1508, %v1512
        %v1528 = vadd.f32 %v1509, %v1512
        %v1529 = vadd.f32 %v1510, %v1512
        %v1530 = vld [vmem:[%s7] sm:$0xff]
        %v1531 = vld [vmem:[%s7 + $0x8] sm:$0xff]
        %v1532 = vld [vmem:[%s7 + $0x10] sm:$0xff]
        %v1533 = vld [vmem:[%s7 + $0x18] sm:$0xff]
        %v1534 = vld [vmem:[%s8] sm:$0x1]
        %v1536 = vperm.slane %v1534, 0
        %v1539 = vsel %vm514, %v1514, 0
        %v1542 = vsel %vm514, %v1515, 0
        %v1545 = vsel %vm514, %v1516, 0
        %v1548 = vsel %vm514, %v1517, 0
        %v1551 = vsel %vm514, %v1518, 0
        %v1554 = vsel %vm514, %v1519, 0
        %v1557 = vsel %vm514, %v1520, 0
        %v1560 = vsel %vm514, %v1521, 0
        %v1563 = vsel %vm514, %v1522, 0
        %v1566 = vsel %vm514, %v1523, 0
        %v1569 = vsel %vm514, %v1524, 0
        %v1572 = vsel %vm514, %v1525, 0
        %v1575 = vsel %vm514, %v1526, 0
        %v1578 = vsel %vm514, %v1527, 0
        %v1581 = vsel %vm514, %v1528, 0
        %v1584 = vsel %vm514, %v1529, 0
        %1586 = vmatpush.msra.mxu0 0.0
        %1587 = vmatpush.msra.mxu0 0.0
        %1588 = vmatpush.msra.mxu0 0.0
        %1589 = vmatpush.msra.mxu0 0.0
        %1590 = vmatpush.msra.mxu0 0.0
        %1591 = vmatpush.msra.mxu0 0.0
        %1592 = vmatpush.msra.mxu0 0.0
        %1593 = vmatpush.msra.mxu0 0.0
        %1594 = vmatpush.msra.mxu0 0.0
        %1595 = vmatpush.msra.mxu0 0.0
        %1596 = vmatpush.msra.mxu0 0.0
        %1597 = vmatpush.msra.mxu0 0.0
        %1598 = vmatpush.msra.mxu0 %v1533
        %1599 = vmatpush.msra.mxu0 %v1532
        %1600 = vmatpush.msra.mxu0 %v1531
        %1601 = vmatpush.msra.mxu0 %v1530
        %1602 = vmatmul.f32.gmra.mxu0 %v1539
        %v1603 = vpop.f32.mrf.mxu0
        %v1604 = vadd.f32 %v1536, %v1603
        %1605 = vmatmul.f32.gmra.mxu0 %v1542
        %v1606 = vpop.f32.mrf.mxu0
        %v1607 = vadd.f32 %v1536, %v1606
        %1608 = vmatmul.f32.gmra.mxu0 %v1545
        %v1609 = vpop.f32.mrf.mxu0
        %v1610 = vadd.f32 %v1536, %v1609
        %1611 = vmatmul.f32.gmra.mxu0 %v1548
        %v1612 = vpop.f32.mrf.mxu0
        %v1613 = vadd.f32 %v1536, %v1612
        %1614 = vmatmul.f32.gmra.mxu0 %v1551
        %v1615 = vpop.f32.mrf.mxu0
        %v1616 = vadd.f32 %v1536, %v1615
        %1617 = vmatmul.f32.gmra.mxu0 %v1554
        %v1618 = vpop.f32.mrf.mxu0
        %v1619 = vadd.f32 %v1536, %v1618
        %1620 = vmatmul.f32.gmra.mxu0 %v1557
        %v1621 = vpop.f32.mrf.mxu0
        %v1622 = vadd.f32 %v1536, %v1621
        %1623 = vmatmul.f32.gmra.mxu0 %v1560
        %v1624 = vpop.f32.mrf.mxu0
        %v1625 = vadd.f32 %v1536, %v1624
        %1626 = vmatmul.f32.gmra.mxu0 %v1563
        %v1627 = vpop.f32.mrf.mxu0
        %v1628 = vadd.f32 %v1536, %v1627
        %1629 = vmatmul.f32.gmra.mxu0 %v1566
        %v1630 = vpop.f32.mrf.mxu0
        %v1631 = vadd.f32 %v1536, %v1630
        %1632 = vmatmul.f32.gmra.mxu0 %v1569
        %v1633 = vpop.f32.mrf.mxu0
        %v1634 = vadd.f32 %v1536, %v1633
        %1635 = vmatmul.f32.gmra.mxu0 %v1572
        %v1636 = vpop.f32.mrf.mxu0
        %v1637 = vadd.f32 %v1536, %v1636
        %1638 = vmatmul.f32.gmra.mxu0 %v1575
        %v1639 = vpop.f32.mrf.mxu0
        %v1640 = vadd.f32 %v1536, %v1639
        %1641 = vmatmul.f32.gmra.mxu0 %v1578
        %v1642 = vpop.f32.mrf.mxu0
        %v1643 = vadd.f32 %v1536, %v1642
        %1644 = vmatmul.f32.gmra.mxu0 %v1581
        %v1645 = vpop.f32.mrf.mxu0
        %v1646 = vadd.f32 %v1536, %v1645
        %1647 = vmatmul.f32.gmra.mxu0 %v1584
        %v1648 = vpop.f32.mrf.mxu0
        %v1649 = vadd.f32 %v1536, %v1648
        %1650 = vdwg.mxu0
        %v1651 = vtanh.pop %v1604
        %v1652 = vtanh.pop %v1607
        %v1653 = vtanh.pop %v1610
        %v1654 = vtanh.pop %v1613
        %v1655 = vtanh.pop %v1616
        %v1656 = vtanh.pop %v1619
        %v1657 = vtanh.pop %v1622
        %v1658 = vtanh.pop %v1625
        %v1659 = vtanh.pop %v1628
        %v1660 = vtanh.pop %v1631
        %v1661 = vtanh.pop %v1634
        %v1662 = vtanh.pop %v1637
        %v1663 = vtanh.pop %v1640
        %v1664 = vtanh.pop %v1643
        %v1665 = vtanh.pop %v1646
        %v1666 = vtanh.pop %v1649
        %v1667 = vld [vmem:[%s9] sm:$0x1]
        %v1668 = vld [vmem:[%s10] sm:$0x1]
        %v1669 = vsel %vm514, %v1651, 0.0
        %1670 = vadd.xlane.f32.xlu0 %v1669
        %v1671 = vpop.xlane.xlu0 %1670
        %v1672 = vsel %vm514, %v1652, 0.0
        %1673 = vadd.xlane.f32.xlu0 %v1672
        %v1674 = vpop.xlane.xlu0 %1673
        %v1675 = vsel %vm514, %v1653, 0.0
        %1676 = vadd.xlane.f32.xlu0 %v1675
        %v1677 = vpop.xlane.xlu0 %1676
        %v1678 = vsel %vm514, %v1654, 0.0
        %1679 = vadd.xlane.f32.xlu0 %v1678
        %v1680 = vpop.xlane.xlu0 %1679
        %v1681 = vsel %vm514, %v1655, 0.0
        %1682 = vadd.xlane.f32.xlu0 %v1681
        %v1683 = vpop.xlane.xlu0 %1682
        %v1684 = vsel %vm514, %v1656, 0.0
        %1685 = vadd.xlane.f32.xlu0 %v1684
        %v1686 = vpop.xlane.xlu0 %1685
        %v1687 = vsel %vm514, %v1657, 0.0
        %1688 = vadd.xlane.f32.xlu0 %v1687
        %v1689 = vpop.xlane.xlu0 %1688
        %v1690 = vsel %vm514, %v1658, 0.0
        %1691 = vadd.xlane.f32.xlu0 %v1690
        %v1692 = vpop.xlane.xlu0 %1691
        %v1693 = vsel %vm514, %v1659, 0.0
        %1694 = vadd.xlane.f32.xlu0 %v1693
        %v1695 = vpop.xlane.xlu0 %1694
        %v1696 = vsel %vm514, %v1660, 0.0
        %1697 = vadd.xlane.f32.xlu0 %v1696
        %v1698 = vpop.xlane.xlu0 %1697
        %v1699 = vsel %vm514, %v1661, 0.0
        %1700 = vadd.xlane.f32.xlu0 %v1699
        %v1701 = vpop.xlane.xlu0 %1700
        %v1702 = vsel %vm514, %v1662, 0.0
        %1703 = vadd.xlane.f32.xlu0 %v1702
        %v1704 = vpop.xlane.xlu0 %1703
        %v1705 = vsel %vm514, %v1663, 0.0
        %1706 = vadd.xlane.f32.xlu0 %v1705
        %v1707 = vpop.xlane.xlu0 %1706
        %v1708 = vsel %vm514, %v1664, 0.0
        %1709 = vadd.xlane.f32.xlu0 %v1708
        %v1710 = vpop.xlane.xlu0 %1709
        %v1711 = vsel %vm514, %v1665, 0.0
        %1712 = vadd.xlane.f32.xlu0 %v1711
        %v1713 = vpop.xlane.xlu0 %1712
        %v1714 = vsel %vm514, %v1666, 0.0
        %1715 = vadd.xlane.f32.xlu0 %v1714
        %v1716 = vpop.xlane.xlu0 %1715
        %v1717 = vmul.f32 %v1671, 0.03125
        %v1718 = vmul.f32 %v1674, 0.03125
        %v1719 = vmul.f32 %v1677, 0.03125
        %v1720 = vmul.f32 %v1680, 0.03125
        %v1721 = vmul.f32 %v1683, 0.03125
        %v1722 = vmul.f32 %v1686, 0.03125
        %v1723 = vmul.f32 %v1689, 0.03125
        %v1724 = vmul.f32 %v1692, 0.03125
        %v1725 = vmul.f32 %v1695, 0.03125
        %v1726 = vmul.f32 %v1698, 0.03125
        %v1727 = vmul.f32 %v1701, 0.03125
        %v1728 = vmul.f32 %v1704, 0.03125
        %v1729 = vmul.f32 %v1707, 0.03125
        %v1730 = vmul.f32 %v1710, 0.03125
        %v1731 = vmul.f32 %v1713, 0.03125
        %v1732 = vmul.f32 %v1716, 0.03125
        %v1733 = vmul.f32 %v1651, %v1651
        %v1734 = vmul.f32 %v1652, %v1652
        %v1735 = vmul.f32 %v1653, %v1653
        %v1736 = vmul.f32 %v1654, %v1654
        %v1737 = vmul.f32 %v1655, %v1655
        %v1738 = vmul.f32 %v1656, %v1656
        %v1739 = vmul.f32 %v1657, %v1657
        %v1740 = vmul.f32 %v1658, %v1658
        %v1741 = vmul.f32 %v1659, %v1659
        %v1742 = vmul.f32 %v1660, %v1660
        %v1743 = vmul.f32 %v1661, %v1661
        %v1744 = vmul.f32 %v1662, %v1662
        %v1745 = vmul.f32 %v1663, %v1663
        %v1746 = vmul.f32 %v1664, %v1664
        %v1747 = vmul.f32 %v1665, %v1665
        %v1748 = vmul.f32 %v1666, %v1666
        %v1749 = vsel %vm514, %v1733, 0.0
        %1750 = vadd.xlane.f32.xlu0 %v1749
        %v1751 = vpop.xlane.xlu0 %1750
        %v1752 = vsel %vm514, %v1734, 0.0
        %1753 = vadd.xlane.f32.xlu0 %v1752
        %v1754 = vpop.xlane.xlu0 %1753
        %v1755 = vsel %vm514, %v1735, 0.0
        %1756 = vadd.xlane.f32.xlu0 %v1755
        %v1757 = vpop.xlane.xlu0 %1756
        %v1758 = vsel %vm514, %v1736, 0.0
        %1759 = vadd.xlane.f32.xlu0 %v1758
        %v1760 = vpop.xlane.xlu0 %1759
        %v1761 = vsel %vm514, %v1737, 0.0
        %1762 = vadd.xlane.f32.xlu0 %v1761
        %v1763 = vpop.xlane.xlu0 %1762
        %v1764 = vsel %vm514, %v1738, 0.0
        %1765 = vadd.xlane.f32.xlu0 %v1764
        %v1766 = vpop.xlane.xlu0 %1765
        %v1767 = vsel %vm514, %v1739, 0.0
        %1768 = vadd.xlane.f32.xlu0 %v1767
        %v1769 = vpop.xlane.xlu0 %1768
        %v1770 = vsel %vm514, %v1740, 0.0
        %1771 = vadd.xlane.f32.xlu0 %v1770
        %v1772 = vpop.xlane.xlu0 %1771
        %v1773 = vsel %vm514, %v1741, 0.0
        %1774 = vadd.xlane.f32.xlu0 %v1773
        %v1775 = vpop.xlane.xlu0 %1774
        %v1776 = vsel %vm514, %v1742, 0.0
        %1777 = vadd.xlane.f32.xlu0 %v1776
        %v1778 = vpop.xlane.xlu0 %1777
        %v1779 = vsel %vm514, %v1743, 0.0
        %1780 = vadd.xlane.f32.xlu0 %v1779
        %v1781 = vpop.xlane.xlu0 %1780
        %v1782 = vsel %vm514, %v1744, 0.0
        %1783 = vadd.xlane.f32.xlu0 %v1782
        %v1784 = vpop.xlane.xlu0 %1783
        %v1785 = vsel %vm514, %v1745, 0.0
        %1786 = vadd.xlane.f32.xlu0 %v1785
        %v1787 = vpop.xlane.xlu0 %1786
        %v1788 = vsel %vm514, %v1746, 0.0
        %1789 = vadd.xlane.f32.xlu0 %v1788
        %v1790 = vpop.xlane.xlu0 %1789
        %v1791 = vsel %vm514, %v1747, 0.0
        %1792 = vadd.xlane.f32.xlu0 %v1791
        %v1793 = vpop.xlane.xlu0 %1792
        %v1794 = vsel %vm514, %v1748, 0.0
        %1795 = vadd.xlane.f32.xlu0 %v1794
        %v1796 = vpop.xlane.xlu0 %1795
        %v1797 = vmul.f32 %v1751, 0.03125
        %v1798 = vmul.f32 %v1754, 0.03125
        %v1799 = vmul.f32 %v1757, 0.03125
        %v1800 = vmul.f32 %v1760, 0.03125
        %v1801 = vmul.f32 %v1763, 0.03125
        %v1802 = vmul.f32 %v1766, 0.03125
        %v1803 = vmul.f32 %v1769, 0.03125
        %v1804 = vmul.f32 %v1772, 0.03125
        %v1805 = vmul.f32 %v1775, 0.03125
        %v1806 = vmul.f32 %v1778, 0.03125
        %v1807 = vmul.f32 %v1781, 0.03125
        %v1808 = vmul.f32 %v1784, 0.03125
        %v1809 = vmul.f32 %v1787, 0.03125
        %v1810 = vmul.f32 %v1790, 0.03125
        %v1811 = vmul.f32 %v1793, 0.03125
        %v1812 = vmul.f32 %v1796, 0.03125
        %v1813 = vmul.f32 %v1717, %v1717
        %v1814 = vmul.f32 %v1718, %v1718
        %v1815 = vmul.f32 %v1719, %v1719
        %v1816 = vmul.f32 %v1720, %v1720
        %v1817 = vmul.f32 %v1721, %v1721
        %v1818 = vmul.f32 %v1722, %v1722
        %v1819 = vmul.f32 %v1723, %v1723
        %v1820 = vmul.f32 %v1724, %v1724
        %v1821 = vmul.f32 %v1725, %v1725
        %v1822 = vmul.f32 %v1726, %v1726
        %v1823 = vmul.f32 %v1727, %v1727
        %v1824 = vmul.f32 %v1728, %v1728
        %v1825 = vmul.f32 %v1729, %v1729
        %v1826 = vmul.f32 %v1730, %v1730
        %v1827 = vmul.f32 %v1731, %v1731
        %v1828 = vmul.f32 %v1732, %v1732
        %v1829 = vsub.f32 %v1797, %v1813
        %v1830 = vsub.f32 %v1798, %v1814
        %v1831 = vsub.f32 %v1799, %v1815
        %v1832 = vsub.f32 %v1800, %v1816
        %v1833 = vsub.f32 %v1801, %v1817
        %v1834 = vsub.f32 %v1802, %v1818
        %v1835 = vsub.f32 %v1803, %v1819
        %v1836 = vsub.f32 %v1804, %v1820
        %v1837 = vsub.f32 %v1805, %v1821
        %v1838 = vsub.f32 %v1806, %v1822
        %v1839 = vsub.f32 %v1807, %v1823
        %v1840 = vsub.f32 %v1808, %v1824
        %v1841 = vsub.f32 %v1809, %v1825
        %v1842 = vsub.f32 %v1810, %v1826
        %v1843 = vsub.f32 %v1811, %v1827
        %v1844 = vsub.f32 %v1812, %v1828
        %v1845 = vmax.f32 %v1829, 0.0
        %v1846 = vmax.f32 %v1830, 0.0
        %v1847 = vmax.f32 %v1831, 0.0
        %v1848 = vmax.f32 %v1832, 0.0
        %v1849 = vmax.f32 %v1833, 0.0
        %v1850 = vmax.f32 %v1834, 0.0
        %v1851 = vmax.f32 %v1835, 0.0
        %v1852 = vmax.f32 %v1836, 0.0
        %v1853 = vmax.f32 %v1837, 0.0
        %v1854 = vmax.f32 %v1838, 0.0
        %v1855 = vmax.f32 %v1839, 0.0
        %v1856 = vmax.f32 %v1840, 0.0
        %v1857 = vmax.f32 %v1841, 0.0
        %v1858 = vmax.f32 %v1842, 0.0
        %v1859 = vmax.f32 %v1843, 0.0
        %v1860 = vmax.f32 %v1844, 0.0
        %v1861 = vsub.f32 %v1651, %v1717
        %v1862 = vsub.f32 %v1652, %v1718
        %v1863 = vsub.f32 %v1653, %v1719
        %v1864 = vsub.f32 %v1654, %v1720
        %v1865 = vsub.f32 %v1655, %v1721
        %v1866 = vsub.f32 %v1656, %v1722
        %v1867 = vsub.f32 %v1657, %v1723
        %v1868 = vsub.f32 %v1658, %v1724
        %v1869 = vsub.f32 %v1659, %v1725
        %v1870 = vsub.f32 %v1660, %v1726
        %v1871 = vsub.f32 %v1661, %v1727
        %v1872 = vsub.f32 %v1662, %v1728
        %v1873 = vsub.f32 %v1663, %v1729
        %v1874 = vsub.f32 %v1664, %v1730
        %v1875 = vsub.f32 %v1665, %v1731
        %v1876 = vsub.f32 %v1666, %v1732
        %v1877 = vadd.f32 %v1845, 1e-05
        %v1878 = vadd.f32 %v1846, 1e-05
        %v1879 = vadd.f32 %v1847, 1e-05
        %v1880 = vadd.f32 %v1848, 1e-05
        %v1881 = vadd.f32 %v1849, 1e-05
        %v1882 = vadd.f32 %v1850, 1e-05
        %v1883 = vadd.f32 %v1851, 1e-05
        %v1884 = vadd.f32 %v1852, 1e-05
        %v1885 = vadd.f32 %v1853, 1e-05
        %v1886 = vadd.f32 %v1854, 1e-05
        %v1887 = vadd.f32 %v1855, 1e-05
        %v1888 = vadd.f32 %v1856, 1e-05
        %v1889 = vadd.f32 %v1857, 1e-05
        %v1890 = vadd.f32 %v1858, 1e-05
        %v1891 = vadd.f32 %v1859, 1e-05
        %v1892 = vadd.f32 %v1860, 1e-05
        %v1893 = vrsqrt.pop %v1877
        %v1894 = vmul.f32 %v1893, %v1877
        %v1895 = vmul.f32 %v1894, %v1893
        %v1896 = vmul.f32 0.5, %v1895
        %v1897 = vsub.f32 1.5, %v1896
        %v1898 = vmul.f32 %v1893, %v1897
        %vm1899 = vweird.f32 %v1877
        %vm1900 = vweird.f32 %v1893
        %vm1901 = vmor %vm1899, %vm1900
        %v1902 = vsel %vm1901, %v1893, %v1898
        %v1903 = vrsqrt.pop %v1878
        %v1904 = vmul.f32 %v1903, %v1878
        %v1905 = vmul.f32 %v1904, %v1903
        %v1906 = vmul.f32 0.5, %v1905
        %v1907 = vsub.f32 1.5, %v1906
        %v1908 = vmul.f32 %v1903, %v1907
        %vm1909 = vweird.f32 %v1878
        %vm1910 = vweird.f32 %v1903
        %vm1911 = vmor %vm1909, %vm1910
        %v1912 = vsel %vm1911, %v1903, %v1908
        %v1913 = vrsqrt.pop %v1879
        %v1914 = vmul.f32 %v1913, %v1879
        %v1915 = vmul.f32 %v1914, %v1913
        %v1916 = vmul.f32 0.5, %v1915
        %v1917 = vsub.f32 1.5, %v1916
        %v1918 = vmul.f32 %v1913, %v1917
        %vm1919 = vweird.f32 %v1879
        %vm1920 = vweird.f32 %v1913
        %vm1921 = vmor %vm1919, %vm1920
        %v1922 = vsel %vm1921, %v1913, %v1918
        %v1923 = vrsqrt.pop %v1880
        %v1924 = vmul.f32 %v1923, %v1880
        %v1925 = vmul.f32 %v1924, %v1923
        %v1926 = vmul.f32 0.5, %v1925
        %v1927 = vsub.f32 1.5, %v1926
        %v1928 = vmul.f32 %v1923, %v1927
        %vm1929 = vweird.f32 %v1880
        %vm1930 = vweird.f32 %v1923
        %vm1931 = vmor %vm1929, %vm1930
        %v1932 = vsel %vm1931, %v1923, %v1928
        %v1933 = vrsqrt.pop %v1881
        %v1934 = vmul.f32 %v1933, %v1881
        %v1935 = vmul.f32 %v1934, %v1933
        %v1936 = vmul.f32 0.5, %v1935
        %v1937 = vsub.f32 1.5, %v1936
        %v1938 = vmul.f32 %v1933, %v1937
        %vm1939 = vweird.f32 %v1881
        %vm1940 = vweird.f32 %v1933
        %vm1941 = vmor %vm1939, %vm1940
        %v1942 = vsel %vm1941, %v1933, %v1938
        %v1943 = vrsqrt.pop %v1882
        %v1944 = vmul.f32 %v1943, %v1882
        %v1945 = vmul.f32 %v1944, %v1943
        %v1946 = vmul.f32 0.5, %v1945
        %v1947 = vsub.f32 1.5, %v1946
        %v1948 = vmul.f32 %v1943, %v1947
        %vm1949 = vweird.f32 %v1882
        %vm1950 = vweird.f32 %v1943
        %vm1951 = vmor %vm1949, %vm1950
        %v1952 = vsel %vm1951, %v1943, %v1948
        %v1953 = vrsqrt.pop %v1883
        %v1954 = vmul.f32 %v1953, %v1883
        %v1955 = vmul.f32 %v1954, %v1953
        %v1956 = vmul.f32 0.5, %v1955
        %v1957 = vsub.f32 1.5, %v1956
        %v1958 = vmul.f32 %v1953, %v1957
        %vm1959 = vweird.f32 %v1883
        %vm1960 = vweird.f32 %v1953
        %vm1961 = vmor %vm1959, %vm1960
        %v1962 = vsel %vm1961, %v1953, %v1958
        %v1963 = vrsqrt.pop %v1884
        %v1964 = vmul.f32 %v1963, %v1884
        %v1965 = vmul.f32 %v1964, %v1963
        %v1966 = vmul.f32 0.5, %v1965
        %v1967 = vsub.f32 1.5, %v1966
        %v1968 = vmul.f32 %v1963, %v1967
        %vm1969 = vweird.f32 %v1884
        %vm1970 = vweird.f32 %v1963
        %vm1971 = vmor %vm1969, %vm1970
        %v1972 = vsel %vm1971, %v1963, %v1968
        %v1973 = vrsqrt.pop %v1885
        %v1974 = vmul.f32 %v1973, %v1885
        %v1975 = vmul.f32 %v1974, %v1973
        %v1976 = vmul.f32 0.5, %v1975
        %v1977 = vsub.f32 1.5, %v1976
        %v1978 = vmul.f32 %v1973, %v1977
        %vm1979 = vweird.f32 %v1885
        %vm1980 = vweird.f32 %v1973
        %vm1981 = vmor %vm1979, %vm1980
        %v1982 = vsel %vm1981, %v1973, %v1978
        %v1983 = vrsqrt.pop %v1886
        %v1984 = vmul.f32 %v1983, %v1886
        %v1985 = vmul.f32 %v1984, %v1983
        %v1986 = vmul.f32 0.5, %v1985
        %v1987 = vsub.f32 1.5, %v1986
        %v1988 = vmul.f32 %v1983, %v1987
        %vm1989 = vweird.f32 %v1886
        %vm1990 = vweird.f32 %v1983
        %vm1991 = vmor %vm1989, %vm1990
        %v1992 = vsel %vm1991, %v1983, %v1988
        %v1993 = vrsqrt.pop %v1887
        %v1994 = vmul.f32 %v1993, %v1887
        %v1995 = vmul.f32 %v1994, %v1993
        %v1996 = vmul.f32 0.5, %v1995
        %v1997 = vsub.f32 1.5, %v1996
        %v1998 = vmul.f32 %v1993, %v1997
        %vm1999 = vweird.f32 %v1887
        %vm2000 = vweird.f32 %v1993
        %vm2001 = vmor %vm1999, %vm2000
        %v2002 = vsel %vm2001, %v1993, %v1998
        %v2003 = vrsqrt.pop %v1888
        %v2004 = vmul.f32 %v2003, %v1888
        %v2005 = vmul.f32 %v2004, %v2003
        %v2006 = vmul.f32 0.5, %v2005
        %v2007 = vsub.f32 1.5, %v2006
        %v2008 = vmul.f32 %v2003, %v2007
        %vm2009 = vweird.f32 %v1888
        %vm2010 = vweird.f32 %v2003
        %vm2011 = vmor %vm2009, %vm2010
        %v2012 = vsel %vm2011, %v2003, %v2008
        %v2013 = vrsqrt.pop %v1889
        %v2014 = vmul.f32 %v2013, %v1889
        %v2015 = vmul.f32 %v2014, %v2013
        %v2016 = vmul.f32 0.5, %v2015
        %v2017 = vsub.f32 1.5, %v2016
        %v2018 = vmul.f32 %v2013, %v2017
        %vm2019 = vweird.f32 %v1889
        %vm2020 = vweird.f32 %v2013
        %vm2021 = vmor %vm2019, %vm2020
        %v2022 = vsel %vm2021, %v2013, %v2018
        %v2023 = vrsqrt.pop %v1890
        %v2024 = vmul.f32 %v2023, %v1890
        %v2025 = vmul.f32 %v2024, %v2023
        %v2026 = vmul.f32 0.5, %v2025
        %v2027 = vsub.f32 1.5, %v2026
        %v2028 = vmul.f32 %v2023, %v2027
        %vm2029 = vweird.f32 %v1890
        %vm2030 = vweird.f32 %v2023
        %vm2031 = vmor %vm2029, %vm2030
        %v2032 = vsel %vm2031, %v2023, %v2028
        %v2033 = vrsqrt.pop %v1891
        %v2034 = vmul.f32 %v2033, %v1891
        %v2035 = vmul.f32 %v2034, %v2033
        %v2036 = vmul.f32 0.5, %v2035
        %v2037 = vsub.f32 1.5, %v2036
        %v2038 = vmul.f32 %v2033, %v2037
        %vm2039 = vweird.f32 %v1891
        %vm2040 = vweird.f32 %v2033
        %vm2041 = vmor %vm2039, %vm2040
        %v2042 = vsel %vm2041, %v2033, %v2038
        %v2043 = vrsqrt.pop %v1892
        %v2044 = vmul.f32 %v2043, %v1892
        %v2045 = vmul.f32 %v2044, %v2043
        %v2046 = vmul.f32 0.5, %v2045
        %v2047 = vsub.f32 1.5, %v2046
        %v2048 = vmul.f32 %v2043, %v2047
        %vm2049 = vweird.f32 %v1892
        %vm2050 = vweird.f32 %v2043
        %vm2051 = vmor %vm2049, %vm2050
        %v2052 = vsel %vm2051, %v2043, %v2048
        %v2053 = vmul.f32 %v1861, %v1902
        %v2054 = vmul.f32 %v1862, %v1912
        %v2055 = vmul.f32 %v1863, %v1922
        %v2056 = vmul.f32 %v1864, %v1932
        %v2057 = vmul.f32 %v1865, %v1942
        %v2058 = vmul.f32 %v1866, %v1952
        %v2059 = vmul.f32 %v1867, %v1962
        %v2060 = vmul.f32 %v1868, %v1972
        %v2061 = vmul.f32 %v1869, %v1982
        %v2062 = vmul.f32 %v1870, %v1992
        %v2063 = vmul.f32 %v1871, %v2002
        %v2064 = vmul.f32 %v1872, %v2012
        %v2065 = vmul.f32 %v1873, %v2022
        %v2066 = vmul.f32 %v1874, %v2032
        %v2067 = vmul.f32 %v1875, %v2042
        %v2068 = vmul.f32 %v1876, %v2052
        %v2070 = vperm.slane %v1667, 0
        %v2072 = vmul.f32 %v2053, %v2070
        %v2073 = vmul.f32 %v2054, %v2070
        %v2074 = vmul.f32 %v2055, %v2070
        %v2075 = vmul.f32 %v2056, %v2070
        %v2076 = vmul.f32 %v2057, %v2070
        %v2077 = vmul.f32 %v2058, %v2070
        %v2078 = vmul.f32 %v2059, %v2070
        %v2079 = vmul.f32 %v2060, %v2070
        %v2080 = vmul.f32 %v2061, %v2070
        %v2081 = vmul.f32 %v2062, %v2070
        %v2082 = vmul.f32 %v2063, %v2070
        %v2083 = vmul.f32 %v2064, %v2070
        %v2084 = vmul.f32 %v2065, %v2070
        %v2085 = vmul.f32 %v2066, %v2070
        %v2086 = vmul.f32 %v2067, %v2070
        %v2087 = vmul.f32 %v2068, %v2070
        %v2089 = vperm.slane %v1668, 0
        %v2091 = vadd.f32 %v2072, %v2089
        %v2092 = vadd.f32 %v2073, %v2089
        %v2093 = vadd.f32 %v2074, %v2089
        %v2094 = vadd.f32 %v2075, %v2089
        %v2095 = vadd.f32 %v2076, %v2089
        %v2096 = vadd.f32 %v2077, %v2089
        %v2097 = vadd.f32 %v2078, %v2089
        %v2098 = vadd.f32 %v2079, %v2089
        %v2099 = vadd.f32 %v2080, %v2089
        %v2100 = vadd.f32 %v2081, %v2089
        %v2101 = vadd.f32 %v2082, %v2089
        %v2102 = vadd.f32 %v2083, %v2089
        %v2103 = vadd.f32 %v2084, %v2089
        %v2104 = vadd.f32 %v2085, %v2089
        %v2105 = vadd.f32 %v2086, %v2089
        %v2106 = vadd.f32 %v2087, %v2089
        %v2107 = vld [vmem:[%s11] sm:$0xff]
        %v2108 = vld [vmem:[%s11 + $0x8] sm:$0xff]
        %v2109 = vld [vmem:[%s11 + $0x10] sm:$0xff]
        %v2110 = vld [vmem:[%s11 + $0x18] sm:$0xff]
        %v2111 = vld [vmem:[%s12] sm:$0x1]
        %v2113 = vperm.slane %v2111, 0
        %v2116 = vsel %vm514, %v2091, 0
        %v2119 = vsel %vm514, %v2092, 0
        %v2122 = vsel %vm514, %v2093, 0
        %v2125 = vsel %vm514, %v2094, 0
        %v2128 = vsel %vm514, %v2095, 0
        %v2131 = vsel %vm514, %v2096, 0
        %v2134 = vsel %vm514, %v2097, 0
        %v2137 = vsel %vm514, %v2098, 0
        %v2140 = vsel %vm514, %v2099, 0
        %v2143 = vsel %vm514, %v2100, 0
        %v2146 = vsel %vm514, %v2101, 0
        %v2149 = vsel %vm514, %v2102, 0
        %v2152 = vsel %vm514, %v2103, 0
        %v2155 = vsel %vm514, %v2104, 0
        %v2158 = vsel %vm514, %v2105, 0
        %v2161 = vsel %vm514, %v2106, 0
        %2163 = vmatpush.msra.mxu0 0.0
        %2164 = vmatpush.msra.mxu0 0.0
        %2165 = vmatpush.msra.mxu0 0.0
        %2166 = vmatpush.msra.mxu0 0.0
        %2167 = vmatpush.msra.mxu0 0.0
        %2168 = vmatpush.msra.mxu0 0.0
        %2169 = vmatpush.msra.mxu0 0.0
        %2170 = vmatpush.msra.mxu0 0.0
        %2171 = vmatpush.msra.mxu0 0.0
        %2172 = vmatpush.msra.mxu0 0.0
        %2173 = vmatpush.msra.mxu0 0.0
        %2174 = vmatpush.msra.mxu0 0.0
        %2175 = vmatpush.msra.mxu0 %v2110
        %2176 = vmatpush.msra.mxu0 %v2109
        %2177 = vmatpush.msra.mxu0 %v2108
        %2178 = vmatpush.msra.mxu0 %v2107
        %2179 = vmatmul.f32.gmra.mxu0 %v2116
        %v2180 = vpop.f32.mrf.mxu0
        %v2181 = vadd.f32 %v2113, %v2180
        %2182 = vmatmul.f32.gmra.mxu0 %v2119
        %v2183 = vpop.f32.mrf.mxu0
        %v2184 = vadd.f32 %v2113, %v2183
        %2185 = vmatmul.f32.gmra.mxu0 %v2122
        %v2186 = vpop.f32.mrf.mxu0
        %v2187 = vadd.f32 %v2113, %v2186
        %2188 = vmatmul.f32.gmra.mxu0 %v2125
        %v2189 = vpop.f32.mrf.mxu0
        %v2190 = vadd.f32 %v2113, %v2189
        %2191 = vmatmul.f32.gmra.mxu0 %v2128
        %v2192 = vpop.f32.mrf.mxu0
        %v2193 = vadd.f32 %v2113, %v2192
        %2194 = vmatmul.f32.gmra.mxu0 %v2131
        %v2195 = vpop.f32.mrf.mxu0
        %v2196 = vadd.f32 %v2113, %v2195
        %2197 = vmatmul.f32.gmra.mxu0 %v2134
        %v2198 = vpop.f32.mrf.mxu0
        %v2199 = vadd.f32 %v2113, %v2198
        %2200 = vmatmul.f32.gmra.mxu0 %v2137
        %v2201 = vpop.f32.mrf.mxu0
        %v2202 = vadd.f32 %v2113, %v2201
        %2203 = vmatmul.f32.gmra.mxu0 %v2140
        %v2204 = vpop.f32.mrf.mxu0
        %v2205 = vadd.f32 %v2113, %v2204
        %2206 = vmatmul.f32.gmra.mxu0 %v2143
        %v2207 = vpop.f32.mrf.mxu0
        %v2208 = vadd.f32 %v2113, %v2207
        %2209 = vmatmul.f32.gmra.mxu0 %v2146
        %v2210 = vpop.f32.mrf.mxu0
        %v2211 = vadd.f32 %v2113, %v2210
        %2212 = vmatmul.f32.gmra.mxu0 %v2149
        %v2213 = vpop.f32.mrf.mxu0
        %v2214 = vadd.f32 %v2113, %v2213
        %2215 = vmatmul.f32.gmra.mxu0 %v2152
        %v2216 = vpop.f32.mrf.mxu0
        %v2217 = vadd.f32 %v2113, %v2216
        %2218 = vmatmul.f32.gmra.mxu0 %v2155
        %v2219 = vpop.f32.mrf.mxu0
        %v2220 = vadd.f32 %v2113, %v2219
        %2221 = vmatmul.f32.gmra.mxu0 %v2158
        %v2222 = vpop.f32.mrf.mxu0
        %v2223 = vadd.f32 %v2113, %v2222
        %2224 = vmatmul.f32.gmra.mxu0 %v2161
        %v2225 = vpop.f32.mrf.mxu0
        %v2226 = vadd.f32 %v2113, %v2225
        %2227 = vdwg.mxu0
        %v2228 = vtanh.pop %v2181
        %v2229 = vtanh.pop %v2184
        %v2230 = vtanh.pop %v2187
        %v2231 = vtanh.pop %v2190
        %v2232 = vtanh.pop %v2193
        %v2233 = vtanh.pop %v2196
        %v2234 = vtanh.pop %v2199
        %v2235 = vtanh.pop %v2202
        %v2236 = vtanh.pop %v2205
        %v2237 = vtanh.pop %v2208
        %v2238 = vtanh.pop %v2211
        %v2239 = vtanh.pop %v2214
        %v2240 = vtanh.pop %v2217
        %v2241 = vtanh.pop %v2220
        %v2242 = vtanh.pop %v2223
        %v2243 = vtanh.pop %v2226
        %v2244 = vld [vmem:[%s13] sm:$0xff]
        %v2245 = vld [vmem:[%s13 + $0x8] sm:$0xff]
        %v2246 = vld [vmem:[%s14] sm:$0x1]
        %v2248 = vperm.slane %v2246, 0
        %vm2250 = vcmask 130048
        %v2252 = vsel %vm2250, %v2228, 0
        %v2255 = vsel %vm2250, %v2229, 0
        %v2258 = vsel %vm2250, %v2230, 0
        %v2261 = vsel %vm2250, %v2231, 0
        %v2264 = vsel %vm2250, %v2232, 0
        %v2267 = vsel %vm2250, %v2233, 0
        %v2270 = vsel %vm2250, %v2234, 0
        %v2273 = vsel %vm2250, %v2235, 0
        %v2276 = vsel %vm2250, %v2236, 0
        %v2279 = vsel %vm2250, %v2237, 0
        %v2282 = vsel %vm2250, %v2238, 0
        %v2285 = vsel %vm2250, %v2239, 0
        %v2288 = vsel %vm2250, %v2240, 0
        %v2291 = vsel %vm2250, %v2241, 0
        %v2294 = vsel %vm2250, %v2242, 0
        %v2297 = vsel %vm2250, %v2243, 0
        %2299 = vmatpush.msra.mxu0 0.0
        %2300 = vmatpush.msra.mxu0 0.0
        %2301 = vmatpush.msra.mxu0 0.0
        %2302 = vmatpush.msra.mxu0 0.0
        %2303 = vmatpush.msra.mxu0 0.0
        %2304 = vmatpush.msra.mxu0 0.0
        %2305 = vmatpush.msra.mxu0 0.0
        %2306 = vmatpush.msra.mxu0 0.0
        %2307 = vmatpush.msra.mxu0 0.0
        %2308 = vmatpush.msra.mxu0 0.0
        %2309 = vmatpush.msra.mxu0 0.0
        %2310 = vmatpush.msra.mxu0 0.0
        %2311 = vmatpush.msra.mxu0 0.0
        %2312 = vmatpush.msra.mxu0 0.0
        %2313 = vmatpush.msra.mxu0 %v2245
        %2314 = vmatpush.msra.mxu0 %v2244
        %2315 = vmatmul.f32.gmra.mxu0 %v2252
        %v2316 = vpop.f32.mrf.mxu0
        %v2317 = vadd.f32 %v2248, %v2316
        %2318 = vmatmul.f32.gmra.mxu0 %v2255
        %v2319 = vpop.f32.mrf.mxu0
        %v2320 = vadd.f32 %v2248, %v2319
        %2321 = vmatmul.f32.gmra.mxu0 %v2258
        %v2322 = vpop.f32.mrf.mxu0
        %v2323 = vadd.f32 %v2248, %v2322
        %2324 = vmatmul.f32.gmra.mxu0 %v2261
        %v2325 = vpop.f32.mrf.mxu0
        %v2326 = vadd.f32 %v2248, %v2325
        %2327 = vmatmul.f32.gmra.mxu0 %v2264
        %v2328 = vpop.f32.mrf.mxu0
        %v2329 = vadd.f32 %v2248, %v2328
        %2330 = vmatmul.f32.gmra.mxu0 %v2267
        %v2331 = vpop.f32.mrf.mxu0
        %v2332 = vadd.f32 %v2248, %v2331
        %2333 = vmatmul.f32.gmra.mxu0 %v2270
        %v2334 = vpop.f32.mrf.mxu0
        %v2335 = vadd.f32 %v2248, %v2334
        %2336 = vmatmul.f32.gmra.mxu0 %v2273
        %v2337 = vpop.f32.mrf.mxu0
        %v2338 = vadd.f32 %v2248, %v2337
        %2339 = vmatmul.f32.gmra.mxu0 %v2276
        %v2340 = vpop.f32.mrf.mxu0
        %v2341 = vadd.f32 %v2248, %v2340
        %2342 = vmatmul.f32.gmra.mxu0 %v2279
        %v2343 = vpop.f32.mrf.mxu0
        %v2344 = vadd.f32 %v2248, %v2343
        %2345 = vmatmul.f32.gmra.mxu0 %v2282
        %v2346 = vpop.f32.mrf.mxu0
        %v2347 = vadd.f32 %v2248, %v2346
        %2348 = vmatmul.f32.gmra.mxu0 %v2285
        %v2349 = vpop.f32.mrf.mxu0
        %v2350 = vadd.f32 %v2248, %v2349
        %2351 = vmatmul.f32.gmra.mxu0 %v2288
        %v2352 = vpop.f32.mrf.mxu0
        %v2353 = vadd.f32 %v2248, %v2352
        %2354 = vmatmul.f32.gmra.mxu0 %v2291
        %v2355 = vpop.f32.mrf.mxu0
        %v2356 = vadd.f32 %v2248, %v2355
        %2357 = vmatmul.f32.gmra.mxu0 %v2294
        %v2358 = vpop.f32.mrf.mxu0
        %v2359 = vadd.f32 %v2248, %v2358
        %2360 = vmatmul.f32.gmra.mxu0 %v2297
        %v2361 = vpop.f32.mrf.mxu0
        %v2362 = vadd.f32 %v2248, %v2361
        %2363 = vdwg.mxu0
        %2364 = vst [vmem:[%s488] sm:$0xff] %v2317
        %2365 = vst [vmem:[%s488 + $0x8] sm:$0xff] %v2320
        %2366 = vst [vmem:[%s488 + $0x10] sm:$0xff] %v2323
        %2367 = vst [vmem:[%s488 + $0x18] sm:$0xff] %v2326
        %2368 = vst [vmem:[%s488 + $0x20] sm:$0xff] %v2329
        %2369 = vst [vmem:[%s488 + $0x28] sm:$0xff] %v2332
        %2370 = vst [vmem:[%s488 + $0x30] sm:$0xff] %v2335
        %2371 = vst [vmem:[%s488 + $0x38] sm:$0xff] %v2338
        %2372 = vst [vmem:[%s488 + $0x40] sm:$0xff] %v2341
        %2373 = vst [vmem:[%s488 + $0x48] sm:$0xff] %v2344
        %2374 = vst [vmem:[%s488 + $0x50] sm:$0xff] %v2347
        %2375 = vst [vmem:[%s488 + $0x58] sm:$0xff] %v2350
        %2376 = vst [vmem:[%s488 + $0x60] sm:$0xff] %v2353
        %2377 = vst [vmem:[%s488 + $0x68] sm:$0xff] %v2356
        %2378 = vst [vmem:[%s488 + $0x70] sm:$0xff] %v2359
        %2379 = vst [vmem:[%s488 + $0x78] sm:$0xff] %v2362
        %s2380 = sand.u32 %s357, 1
        %s2381 = scalar_lea.sflag [#allocation3], %s2380
        %s2382 = sand.u32 %s357, 1
        %s2383 = smul.addr %s2382, 128
        %s2384 = scalar_lea.vmem [#allocation2], %s2383
        // Predicated region
        $region81: #{tpu_custom_call.1} parent=79 // pred_check
          %p2385 = pneg %p367
        $region82: #{tpu_custom_call.1} parent=79 // pred_check_branch
          %2387 = sbr.rel (%p2385) target = $region84
        $region83: #{tpu_custom_call.1} parent=79 // pred_region
          %s2388 = smul.u32 16, %s29
          %2390 = vsyncadd %s2381, 0
          %s2391 = smul.addr %s2388, 8
          %s2392 = scalar_lea.hbm %s15, %s2391
          %s2393 = sshll.u32 %s2384, 4
          %s2394 = int_to_ptr.vmem [resolvable:$true] %s2393
          %s2395 = sshll.u32 %s2392, 4
          %s2396 = int_to_ptr.hbm [resolvable:$true] %s2395
          %2401 = dma.vmem_to_hbm [thread:$0]  %s2394, 2048, %s2396, %s2381, 128, 128, 8
        $region84: #{tpu_custom_call.1} parent=79 // pred_fallthru
          _
      $region80: #{tpu_custom_call.1} parent=5 // pred_fallthru
        _
      %p2402 = scmp.le.s32.totalorder 2, %s24
      // Predicated region
      $region85: #{tpu_custom_call.1} parent=5 // pred_check
        %p2403 = pneg %p2402
      $region86: #{tpu_custom_call.1} parent=5 // pred_check_branch
        %2405 = sbr.rel (%p2403) target = $region88
      $region87: #{tpu_custom_call.1} parent=5 // pred_region
        %s2406 = ssub.s32 %s24, 2
        // Predicated region
        $region89: #{tpu_custom_call.1} parent=87 // pred_check
          %p2407 = pneg %p373
        $region90: #{tpu_custom_call.1} parent=87 // pred_check_branch
          %2409 = sbr.rel (%p2407) target = $region92
        $region91: #{tpu_custom_call.1} parent=87 // pred_region
          %s2410 = sand.u32 %s358, 1
          %s2411 = scalar_lea.sflag [#allocation3], %s2410
          %s2412 = sand.u32 %s358, 1
          %s2413 = smul.addr %s2412, 128
          %s2414 = scalar_lea.vmem [#allocation2], %s2413
          %2416 = dma.done %s2411, 2048
        $region92: #{tpu_custom_call.1} parent=87 // pred_fallthru
          _
      $region88: #{tpu_custom_call.1} parent=5 // pred_fallthru
        _
    $region6: #{tpu_custom_call.1} parent=1 // loop_footer
      %s28 = sadd.s32 1, %s24
    $region7: #{tpu_custom_call.1} parent=1 // loop_footer_branch
      %23 = sbr.rel target = $region3
    $region8: #{tpu_custom_call.1} parent=1 // loop_exit
      _
    %2417 = vsyncpa [#allocation3], 1
    %s2418 = scalar_lea.sflag [#allocation3], 1
    %2419 = vsyncpa %s2418, 1

</llo_original>
